<compile_context>
chip_gen: v7x
topology: tpu7x:2x2x1
jax: 0.10.0
libtpu: 0.0.40
codegen_flags: <defaults>
</compile_context>

<pallas_src>
import math
import functools

import jax
import jax.numpy as jnp
import numpy as np
from jax import lax
from jax.experimental import pallas as pl
from jax.experimental.pallas import tpu as pltpu


def _rel_pos_kernel(loc_ref, idx_ref, bq_ref, q_ref, k_ref,
                    wq_ref, wk_ref, wl_ref, u_ref, v_ref, s_ref,
                    o_ref, k_scratch, *, q_tile, m, lamda):
    # loc_ref   : (1, rows, P)      pairwise locations, rows = q_tile * m
    # idx_ref   : (1, rows, 1)      int32 neighbourhood indices into the key axis
    # bq_ref    : (rows, q_tile)    static row -> query broadcast matrix (resident)
    # q_ref     : (1, q_tile, F)    query features for this (batch, query-tile)
    # k_ref     : (1, N, F)         key features for this batch
    # wq_ref    : (F, E)            full W_q (resident)
    # wk_ref    : (F, E)            full W_k (resident)
    # wl_ref    : (P, E)            full W_l (resident)
    # u_ref     : (1, E)            content bias, head-major flattened (resident)
    # v_ref     : (1, E)            position bias, head-major flattened (resident)
    # s_ref     : (H, E)            per-head segment-sum matrix, 1/sqrt(d) folded in
    # o_ref     : (1, H, rows)      logits, lane-dense over rows
    # k_scratch : (N, E)            per-batch projected keys (persists across tiles)
    rows = q_tile * m
    t = pl.program_id(1)

    # Project the keys once per batch (t is the inner grid axis, marked "arbitrary").
    @pl.when(t == 0)
    def _():
        k_scratch[...] = jnp.dot(k_ref[0], wk_ref[...],
                                 preferred_element_type=jnp.float32)       # (N, E)

    qf = q_ref[0]                        # (q_tile, F)
    loc = loc_ref[0]                     # (rows, P)
    idx = idx_ref[0]                     # (rows, 1) int32
    n_keys = k_scratch.shape[0]

    # Full-width projections (MXU, output width = E).
    Q = jnp.dot(qf, wq_ref[...], preferred_element_type=jnp.float32)       # (q_tile, E)
    e = jnp.dot(loc, wl_ref[...], preferred_element_type=jnp.float32)      # (rows, E)

    # Gather the neighbourhood keys with a one-hot matmul on the MXU:
    # Kg[r] = K[nbhd_idx[r]].  Out-of-range indices contribute 0.
    onehot = (idx == lax.broadcasted_iota(jnp.int32, (rows, n_keys), 1)
              ).astype(jnp.float32)                                        # (rows, N)
    Kg = jnp.dot(onehot, k_scratch[...],
                 preferred_element_type=jnp.float32)                       # (rows, E)

    # Fold the content bias u into Q; fold lamda into the positional bias path while
    # still at (q_tile, E) width, then broadcast each query row across its m
    # neighbours with the static selection matrix (MXU, no reshape copies).
    Qu = Q + u_ref[...]                                                    # (q_tile, E)
    Qv = (Q + v_ref[...]) * lamda                                          # (q_tile, E)
    Qu_b = jnp.dot(bq_ref[...], Qu, preferred_element_type=jnp.float32)    # (rows, E)
    Qv_b = jnp.dot(bq_ref[...], Qv, preferred_element_type=jnp.float32)    # (rows, E)

    prod = Kg * Qu_b + e * Qv_b                                            # (rows, E)

    # Per-head reduction over head_dim as one MXU matmul (A @ B^T form) so the result
    # comes out (H, rows) -> lane-dense store over rows.
    out = lax.dot_general(s_ref[...], prod, (((1,), (1,)), ((), ())),
                          preferred_element_type=jnp.float32)              # (H, rows)
    o_ref[0] = out.astype(o_ref.dtype)


def relative_position_kernel(pairwise_locations, mask, query_features,
                             key_features, nbhd_idx,
                             Wq, Wk, Wl, u, v, *, n_heads, lamda=1.0,
                             q_tile=None):
    """Pallas forward of RelativePositionKernel. Returns (b, n, m, n_heads)."""
    # The reference forward only uses `mask` for its batch size (u/v repeat); the
    # logits are not masked in this module, so mask is intentionally unused here.
    del mask
    B, n, m, P = pairwise_locations.shape
    _, n_keys, F = key_features.shape
    E = Wq.shape[1]
    assert E % n_heads == 0, "embed_dim must be divisible by n_heads"
    d = E // n_heads

    if q_tile is None:
        q_tile = n                       # single query tile (fine for small n*m)
    assert n % q_tile == 0
    n_tiles = n // q_tile
    rows = q_tile * m
    if n_tiles > 1:
        # Tiled query blocks must respect the (8, 128) layout constraints.
        assert q_tile % 8 == 0 and rows % 128 == 0

    loc2d = pairwise_locations.reshape(B, n * m, P)
    idx3 = nbhd_idx.astype(jnp.int32).reshape(B, n * m, 1)
    u_row = u.reshape(1, E)              # head-major flatten matches (h d) columns
    v_row = v.reshape(1, E)
    # Per-head segment-sum matrix with the 1/sqrt(head_dim) scale folded in.
    S = ((jnp.arange(E)[None, :] // d) == jnp.arange(n_heads)[:, None]
         ).astype(jnp.float32) / math.sqrt(d)
    # Static row -> query broadcast matrix: Bq[r, q] = 1 iff r // m == q.
    Bq = ((jnp.arange(rows)[:, None] // m) == jnp.arange(q_tile)[None, :]
          ).astype(jnp.float32)

    out = pl.pallas_call(
        functools.partial(_rel_pos_kernel, q_tile=q_tile, m=m,
                          lamda=float(lamda)),
        out_shape=jax.ShapeDtypeStruct((B, n_heads, n * m), jnp.float32),
        grid_spec=pltpu.PrefetchScalarGridSpec(
            num_scalar_prefetch=0,
            grid=(B, n_tiles),
            in_specs=[
                pl.BlockSpec((1, rows, P), lambda b, t: (b, t, 0)),
                pl.BlockSpec((1, rows, 1), lambda b, t: (b, t, 0)),
                # Static broadcast matrix: grid-independent -> DMA'd once, resident.
                pl.BlockSpec((rows, q_tile), lambda b, t: (0, 0)),
                pl.BlockSpec((1, q_tile, F), lambda b, t: (b, t, 0)),
                # keys: t-independent -> re-DMA'd only when the batch changes.
                pl.BlockSpec((1, n_keys, F), lambda b, t: (b, 0, 0)),
                # Full weights / biases / selection matrix: grid-independent index
                # maps -> one DMA, resident in VMEM for the whole grid.
                pl.BlockSpec((F, E), lambda b, t: (0, 0)),
                pl.BlockSpec((F, E), lambda b, t: (0, 0)),
                pl.BlockSpec((P, E), lambda b, t: (0, 0)),
                pl.BlockSpec((1, E), lambda b, t: (0, 0)),
                pl.BlockSpec((1, E), lambda b, t: (0, 0)),
                pl.BlockSpec((n_heads, E), lambda b, t: (0, 0)),
            ],
            out_specs=pl.BlockSpec((1, n_heads, rows), lambda b, t: (b, 0, t)),
            scratch_shapes=[pltpu.VMEM((n_keys, E), jnp.float32)],
        ),
        compiler_params=pltpu.CompilerParams(
            # Key-projection scratch carries state across the query-tile axis.
            dimension_semantics=("parallel", "arbitrary")),
    )(loc2d, idx3, Bq, query_features, key_features, Wq, Wk, Wl, u_row, v_row, S)

    # (b, h, n*m) -> (b, n, m, h), matching the PyTorch rearrange.
    return jnp.transpose(out.reshape(B, n_heads, n, m), (0, 2, 3, 1))


def reference(pairwise, qfeat, kfeat, nbhd, Wq, Wk, Wl, u, v, n_heads, lamda):
    """Pure-JAX reference matching the PyTorch forward."""
    B, n, m, P = pairwise.shape
    n_keys = kfeat.shape[1]
    E = Wq.shape[1]
    d = E // n_heads
    Q = (qfeat @ Wq).reshape(B, n, n_heads, d)
    K = (kfeat @ Wk).reshape(B, n_keys, n_heads, d)
    e = (pairwise @ Wl).reshape(B, n, m, n_heads, d)
    scores = jnp.einsum('bnhd,bkhd->bhnk', Q, K)
    uK = jnp.einsum('hzd,bkhd->bhk', u, K)
    idx = jnp.broadcast_to(nbhd[:, None, :, :], (B, n_heads, n, m))
    term1 = jnp.take_along_axis(scores, idx, axis=3)
    term3 = jnp.take_along_axis(
        jnp.broadcast_to(uK[:, :, None, :], (B, n_heads, n, n_keys)), idx, axis=3)
    qv = Q + v[None, None, :, 0, :]
    term2 = jnp.einsum('bnmhd,bnhd->bhnm', e, qv)
    A = (term1 + lamda * term2 + term3) / math.sqrt(d)
    return jnp.transpose(A, (0, 2, 3, 1))


if __name__ == "__main__":
    B, n, m, n_keys = 2, 8, 8, 8
    feature_dim, position_dim = 16, 3
    embed_dim, n_heads = 32, 4
    lamda = 0.5
    d = embed_dim // n_heads

    keys = jax.random.split(jax.random.PRNGKey(0), 9)
    pairwise = jax.random.normal(keys[0], (B, n, m, position_dim), jnp.float32)
    qfeat = jax.random.normal(keys[1], (B, n, feature_dim), jnp.float32)
    kfeat = jax.random.normal(keys[2], (B, n_keys, feature_dim), jnp.float32)
    nbhd = jax.random.randint(keys[3], (B, n, m), 0, n_keys, jnp.int32)
    mask = jnp.ones((B, n, m), jnp.bool_)

    # Deterministic synthetic parameters (module __init__ gives the shapes;
    # u/v are zeros in __init__, but we use nonzero values to exercise all terms).
    Wq = 0.1 * jax.random.normal(keys[4], (feature_dim, embed_dim), jnp.float32)
    Wk = 0.1 * jax.random.normal(keys[5], (feature_dim, embed_dim), jnp.float32)
    Wl = 0.1 * jax.random.normal(keys[6], (position_dim, embed_dim), jnp.float32)
    u = 0.1 * jax.random.normal(keys[7], (n_heads, 1, d), jnp.float32)
    v = 0.1 * jax.random.normal(keys[8], (n_heads, 1, d), jnp.float32)

    out = relative_position_kernel(pairwise, mask, qfeat, kfeat, nbhd,
                                   Wq, Wk, Wl, u, v,
                                   n_heads=n_heads, lamda=lamda)
    out = jax.block_until_ready(out)

    ref = reference(pairwise, qfeat, kfeat, nbhd, Wq, Wk, Wl, u, v,
                    n_heads, lamda)
    np.testing.assert_allclose(np.asarray(out), np.asarray(ref),
                               rtol=1e-3, atol=1e-3)
    print("KERNEL_OK")
</pallas_src>

<mosaic_0001>
module attributes {stable_mosaic.version = 11 : i64} {
  func.func @_rel_pos_kernel(%arg0: i32, %arg1: i32, %arg2: memref<1x64x3xf32, #tpu.memory_space<vmem>>, %arg3: memref<1x64x1xi32, #tpu.memory_space<vmem>>, %arg4: memref<64x8xf32, #tpu.memory_space<vmem>>, %arg5: memref<1x8x16xf32, #tpu.memory_space<vmem>>, %arg6: memref<1x8x16xf32, #tpu.memory_space<vmem>>, %arg7: memref<16x32xf32, #tpu.memory_space<vmem>>, %arg8: memref<16x32xf32, #tpu.memory_space<vmem>>, %arg9: memref<3x32xf32, #tpu.memory_space<vmem>>, %arg10: memref<1x32xf32, #tpu.memory_space<vmem>>, %arg11: memref<1x32xf32, #tpu.memory_space<vmem>>, %arg12: memref<4x32xf32, #tpu.memory_space<vmem>>, %arg13: memref<1x4x64xf32, #tpu.memory_space<vmem>>, %arg14: memref<8x32xf32, #tpu.memory_space<vmem>>) attributes {dimension_semantics = [#tpu.dimension_semantics<parallel>, #tpu.dimension_semantics<arbitrary>], iteration_bounds = array<i64: 2, 1>, scalar_prefetch = 0 : i64, scratch_operands = 1 : i64, tpu.core_type = #tpu.core_type<tc>, window_params = [{transform_indices = @transform_0, window_bounds = array<i64: 1, 64, 3>}, {transform_indices = @transform_1, window_bounds = array<i64: 1, 64, 1>}, {pipeline_mode = #tpu.pipeline_mode<synchronous>, transform_indices = @transform_2, window_bounds = array<i64: 64, 8>}, {transform_indices = @transform_3, window_bounds = array<i64: 1, 8, 16>}, {transform_indices = @transform_4, window_bounds = array<i64: 1, 8, 16>}, {pipeline_mode = #tpu.pipeline_mode<synchronous>, transform_indices = @transform_5, window_bounds = array<i64: 16, 32>}, {pipeline_mode = #tpu.pipeline_mode<synchronous>, transform_indices = @transform_6, window_bounds = array<i64: 16, 32>}, {pipeline_mode = #tpu.pipeline_mode<synchronous>, transform_indices = @transform_7, window_bounds = array<i64: 3, 32>}, {pipeline_mode = #tpu.pipeline_mode<synchronous>, transform_indices = @transform_8, window_bounds = array<i64: 1, 32>}, {pipeline_mode = #tpu.pipeline_mode<synchronous>, transform_indices = @transform_9, window_bounds = array<i64: 1, 32>}, {pipeline_mode = #tpu.pipeline_mode<synchronous>, transform_indices = @transform_10, window_bounds = array<i64: 4, 32>}, {transform_indices = @transform_11, window_bounds = array<i64: 1, 4, 64>}]} {
    %c0_i32 = arith.constant 0 : i32
    %0 = arith.cmpi eq, %arg1, %c0_i32 : i32
    %1 = arith.extui %0 : i1 to i32
    %c0_i32_0 = arith.constant 0 : i32
    %2 = arith.cmpi ne, %1, %c0_i32_0 : i32
    scf.if %2 {
      %c0_34 = arith.constant 0 : index
      %c0_35 = arith.constant 0 : index
      %c0_36 = arith.constant 0 : index
      %40 = vector.load %arg6[%c0_34, %c0_35, %c0_36] : memref<1x8x16xf32, #tpu.memory_space<vmem>>, vector<1x8x16xf32>
      %41 = vector.shape_cast %40 : vector<1x8x16xf32> to vector<8x16xf32>
      %c0_37 = arith.constant 0 : index
      %c0_38 = arith.constant 0 : index
      %42 = vector.load %arg8[%c0_37, %c0_38] : memref<16x32xf32, #tpu.memory_space<vmem>>, vector<16x32xf32>
      %cst_39 = arith.constant dense<0.000000e+00> : vector<8x32xf32>
      %43 = tpu.matmul %41, %42, %cst_39 {dimension_numbers = #tpu.dot_dimension_numbers<[1], [0], [0], [1], [0, 0, 1, 1], [], []>} : vector<8x16xf32>, vector<16x32xf32>, vector<8x32xf32> -> vector<8x32xf32>
      %c0_40 = arith.constant 0 : index
      %c0_41 = arith.constant 0 : index
      %44 = vector.load %arg14[%c0_40, %c0_41] : memref<8x32xf32, #tpu.memory_space<vmem>>, vector<8x32xf32>
      tpu.vector_store %arg14[%c0_40, %c0_41], %43 {strides = array<i32>} : memref<8x32xf32, #tpu.memory_space<vmem>>, vector<8x32xf32>,
    } else {
    }
    %c0 = arith.constant 0 : index
    %c0_1 = arith.constant 0 : index
    %c0_2 = arith.constant 0 : index
    %3 = vector.load %arg5[%c0, %c0_1, %c0_2] : memref<1x8x16xf32, #tpu.memory_space<vmem>>, vector<1x8x16xf32>
    %4 = vector.shape_cast %3 : vector<1x8x16xf32> to vector<8x16xf32>
    %c0_3 = arith.constant 0 : index
    %c0_4 = arith.constant 0 : index
    %c0_5 = arith.constant 0 : index
    %5 = vector.load %arg2[%c0_3, %c0_4, %c0_5] : memref<1x64x3xf32, #tpu.memory_space<vmem>>, vector<1x64x3xf32>
    %6 = vector.shape_cast %5 : vector<1x64x3xf32> to vector<64x3xf32>
    %c0_6 = arith.constant 0 : index
    %c0_7 = arith.constant 0 : index
    %c0_8 = arith.constant 0 : index
    %7 = vector.load %arg3[%c0_6, %c0_7, %c0_8] : memref<1x64x1xi32, #tpu.memory_space<vmem>>, vector<1x64x1xi32>
    %8 = vector.shape_cast %7 : vector<1x64x1xi32> to vector<64x1xi32>
    %c0_9 = arith.constant 0 : index
    %c0_10 = arith.constant 0 : index
    %9 = vector.load %arg7[%c0_9, %c0_10] : memref<16x32xf32, #tpu.memory_space<vmem>>, vector<16x32xf32>
    %cst = arith.constant dense<0.000000e+00> : vector<8x32xf32>
    %10 = tpu.matmul %4, %9, %cst {dimension_numbers = #tpu.dot_dimension_numbers<[1], [0], [0], [1], [0, 0, 1, 1], [], []>} : vector<8x16xf32>, vector<16x32xf32>, vector<8x32xf32> -> vector<8x32xf32>
    %c0_11 = arith.constant 0 : index
    %c0_12 = arith.constant 0 : index
    %11 = vector.load %arg9[%c0_11, %c0_12] : memref<3x32xf32, #tpu.memory_space<vmem>>, vector<3x32xf32>
    %cst_13 = arith.constant dense<0.000000e+00> : vector<64x32xf32>
    %12 = tpu.matmul %6, %11, %cst_13 {dimension_numbers = #tpu.dot_dimension_numbers<[1], [0], [0], [1], [0, 0, 1, 1], [], []>} : vector<64x3xf32>, vector<3x32xf32>, vector<64x32xf32> -> vector<64x32xf32>
    %13 = tpu.iota {dimensions = array<i32: 1>} : vector<64x8xi32>
    %14 = vector.broadcast %8 : vector<64x1xi32> to vector<64x8xi32>
    %15 = arith.cmpi eq, %14, %13 : vector<64x8xi32>
    %16 = arith.extui %15 : vector<64x8xi1> to vector<64x8xi32>
    %17 = arith.sitofp %16 : vector<64x8xi32> to vector<64x8xf32>
    %c0_14 = arith.constant 0 : index
    %c0_15 = arith.constant 0 : index
    %18 = vector.load %arg14[%c0_14, %c0_15] : memref<8x32xf32, #tpu.memory_space<vmem>>, vector<8x32xf32>
    %cst_16 = arith.constant dense<0.000000e+00> : vector<64x32xf32>
    %19 = tpu.matmul %17, %18, %cst_16 {dimension_numbers = #tpu.dot_dimension_numbers<[1], [0], [0], [1], [0, 0, 1, 1], [], []>} : vector<64x8xf32>, vector<8x32xf32>, vector<64x32xf32> -> vector<64x32xf32>
    %c0_17 = arith.constant 0 : index
    %c0_18 = arith.constant 0 : index
    %20 = vector.load %arg10[%c0_17, %c0_18] : memref<1x32xf32, #tpu.memory_space<vmem>>, vector<1x32xf32>
    %21 = vector.broadcast %20 : vector<1x32xf32> to vector<8x32xf32>
    %22 = arith.addf %10, %21 : vector<8x32xf32>
    %c0_19 = arith.constant 0 : index
    %c0_20 = arith.constant 0 : index
    %23 = vector.load %arg11[%c0_19, %c0_20] : memref<1x32xf32, #tpu.memory_space<vmem>>, vector<1x32xf32>
    %24 = vector.broadcast %23 : vector<1x32xf32> to vector<8x32xf32>
    %25 = arith.addf %10, %24 : vector<8x32xf32>
    %cst_21 = arith.constant 5.000000e-01 : f32
    %26 = vector.broadcast %cst_21 : f32 to vector<8x32xf32>
    %27 = arith.mulf %25, %26 : vector<8x32xf32>
    %c0_22 = arith.constant 0 : index
    %c0_23 = arith.constant 0 : index
    %28 = vector.load %arg4[%c0_22, %c0_23] : memref<64x8xf32, #tpu.memory_space<vmem>>, vector<64x8xf32>
    %cst_24 = arith.constant dense<0.000000e+00> : vector<64x32xf32>
    %29 = tpu.matmul %28, %22, %cst_24 {dimension_numbers = #tpu.dot_dimension_numbers<[1], [0], [0], [1], [0, 0, 1, 1], [], []>} : vector<64x8xf32>, vector<8x32xf32>, vector<64x32xf32> -> vector<64x32xf32>
    %c0_25 = arith.constant 0 : index
    %c0_26 = arith.constant 0 : index
    %30 = vector.load %arg4[%c0_25, %c0_26] : memref<64x8xf32, #tpu.memory_space<vmem>>, vector<64x8xf32>
    %cst_27 = arith.constant dense<0.000000e+00> : vector<64x32xf32>
    %31 = tpu.matmul %30, %27, %cst_27 {dimension_numbers = #tpu.dot_dimension_numbers<[1], [0], [0], [1], [0, 0, 1, 1], [], []>} : vector<64x8xf32>, vector<8x32xf32>, vector<64x32xf32> -> vector<64x32xf32>
    %32 = arith.mulf %19, %29 : vector<64x32xf32>
    %33 = arith.mulf %12, %31 : vector<64x32xf32>
    %34 = arith.addf %32, %33 : vector<64x32xf32>
    %c0_28 = arith.constant 0 : index
    %c0_29 = arith.constant 0 : index
    %35 = vector.load %arg12[%c0_28, %c0_29] : memref<4x32xf32, #tpu.memory_space<vmem>>, vector<4x32xf32>
    %cst_30 = arith.constant dense<0.000000e+00> : vector<4x64xf32>
    %36 = tpu.matmul %35, %34, %cst_30 {dimension_numbers = #tpu.dot_dimension_numbers<[1], [1], [0], [0], [0, 0, 1, 0], [], []>} : vector<4x32xf32>, vector<64x32xf32>, vector<4x64xf32> -> vector<4x64xf32>
    %c0_31 = arith.constant 0 : index
    %c0_32 = arith.constant 0 : index
    %c0_33 = arith.constant 0 : index
    %37 = vector.load %arg13[%c0_31, %c0_32, %c0_33] : memref<1x4x64xf32, #tpu.memory_space<vmem>>, vector<1x4x64xf32>
    %38 = vector.shape_cast %37 : vector<1x4x64xf32> to vector<4x64xf32>
    %39 = vector.shape_cast %36 : vector<4x64xf32> to vector<1x4x64xf32>
    tpu.vector_store %arg13[%c0_31, %c0_32, %c0_33], %39 {strides = array<i32>} : memref<1x4x64xf32, #tpu.memory_space<vmem>>, vector<1x4x64xf32>,
    return
  }
  func.func @transform_0(%arg0: i32, %arg1: i32) -> (i32, i32, i32) {
    %c0_i32 = arith.constant 0 : i32
    %c0_i32_0 = arith.constant 0 : i32
    return %arg0, %arg1, %c0_i32 : i32, i32, i32
  }
  func.func @transform_1(%arg0: i32, %arg1: i32) -> (i32, i32, i32) {
    %c0_i32 = arith.constant 0 : i32
    %c0_i32_0 = arith.constant 0 : i32
    return %arg0, %arg1, %c0_i32 : i32, i32, i32
  }
  func.func @transform_2(%arg0: i32, %arg1: i32) -> (i32, i32) {
    %c0_i32 = arith.constant 0 : i32
    %c0_i32_0 = arith.constant 0 : i32
    %c0_i32_1 = arith.constant 0 : i32
    return %c0_i32, %c0_i32_0 : i32, i32
  }
  func.func @transform_3(%arg0: i32, %arg1: i32) -> (i32, i32, i32) {
    %c0_i32 = arith.constant 0 : i32
    %c0_i32_0 = arith.constant 0 : i32
    return %arg0, %arg1, %c0_i32 : i32, i32, i32
  }
  func.func @transform_4(%arg0: i32, %arg1: i32) -> (i32, i32, i32) {
    %c0_i32 = arith.constant 0 : i32
    %c0_i32_0 = arith.constant 0 : i32
    %c0_i32_1 = arith.constant 0 : i32
    return %arg0, %c0_i32, %c0_i32_0 : i32, i32, i32
  }
  func.func @transform_5(%arg0: i32, %arg1: i32) -> (i32, i32) {
    %c0_i32 = arith.constant 0 : i32
    %c0_i32_0 = arith.constant 0 : i32
    %c0_i32_1 = arith.constant 0 : i32
    return %c0_i32, %c0_i32_0 : i32, i32
  }
  func.func @transform_6(%arg0: i32, %arg1: i32) -> (i32, i32) {
    %c0_i32 = arith.constant 0 : i32
    %c0_i32_0 = arith.constant 0 : i32
    %c0_i32_1 = arith.constant 0 : i32
    return %c0_i32, %c0_i32_0 : i32, i32
  }
  func.func @transform_7(%arg0: i32, %arg1: i32) -> (i32, i32) {
    %c0_i32 = arith.constant 0 : i32
    %c0_i32_0 = arith.constant 0 : i32
    %c0_i32_1 = arith.constant 0 : i32
    return %c0_i32, %c0_i32_0 : i32, i32
  }
  func.func @transform_8(%arg0: i32, %arg1: i32) -> (i32, i32) {
    %c0_i32 = arith.constant 0 : i32
    %c0_i32_0 = arith.constant 0 : i32
    %c0_i32_1 = arith.constant 0 : i32
    return %c0_i32, %c0_i32_0 : i32, i32
  }
  func.func @transform_9(%arg0: i32, %arg1: i32) -> (i32, i32) {
    %c0_i32 = arith.constant 0 : i32
    %c0_i32_0 = arith.constant 0 : i32
    %c0_i32_1 = arith.constant 0 : i32
    return %c0_i32, %c0_i32_0 : i32, i32
  }
  func.func @transform_10(%arg0: i32, %arg1: i32) -> (i32, i32) {
    %c0_i32 = arith.constant 0 : i32
    %c0_i32_0 = arith.constant 0 : i32
    %c0_i32_1 = arith.constant 0 : i32
    return %c0_i32, %c0_i32_0 : i32, i32
  }
  func.func @transform_11(%arg0: i32, %arg1: i32) -> (i32, i32, i32) {
    %c0_i32 = arith.constant 0 : i32
    %c0_i32_0 = arith.constant 0 : i32
    return %arg0, %c0_i32, %arg1 : i32, i32, i32
  }
}

</mosaic_0001>

<llo_original>
// kernel: tpu_custom_call.1
$region0: #{tpu_custom_call.1}
  #allocation0 [shape = 'u32[]', space=smem, size = 0x4, offset = 0x4, fixed_abs, tag = 'smem constant byte address 0x4 - core index']
  #allocation1 [shape = 'u32[144,128]{1,0:T(1,128)}', space=vmem, size = 0x12000, scoped, tag = 'internal scratch']
  #allocation2 [shape = 'f32[8,32]{1,0:T(8,128)}', space=vmem, size = 0x1000, scoped, tag = 'scratch operand']
  %s0 = inlined_call_operand.vmem [shape: f32[2,64,3], index: 0, kind: input, shape index: {}]
  %s1 = inlined_call_operand.vmem [shape: s32[2,64,1], index: 1, kind: input, shape index: {}]
  %s2 = inlined_call_operand.vmem [shape: f32[64,8], index: 2, kind: input, shape index: {}]
  %s3 = inlined_call_operand.vmem [shape: f32[2,8,16], index: 3, kind: input, shape index: {}]
  %s4 = inlined_call_operand.vmem [shape: f32[2,8,16], index: 4, kind: input, shape index: {}]
  %s5 = inlined_call_operand.vmem [shape: f32[16,32], index: 5, kind: input, shape index: {}]
  %s6 = inlined_call_operand.vmem [shape: f32[16,32], index: 6, kind: input, shape index: {}]
  %s7 = inlined_call_operand.vmem [shape: f32[3,32], index: 7, kind: input, shape index: {}]
  %s8 = inlined_call_operand.vmem [shape: f32[1,32], index: 8, kind: input, shape index: {}]
  %s9 = inlined_call_operand.vmem [shape: f32[1,32], index: 9, kind: input, shape index: {}]
  %s10 = inlined_call_operand.vmem [shape: f32[4,32], index: 10, kind: input, shape index: {}]
  %s11 = inlined_call_operand.hbm [shape: f32[2,4,64], index: 11, kind: output, shape index: {}]
  %s12 = sld [smem:[#allocation0]]
  $region81: #{tpu_custom_call.1} parent=0
    _
  %s14 = ssub.s32 1, %s12
  %s15 = scalar_select 0, %s14, %s12
  $region1: #{tpu_custom_call.1} parent=0
    #allocation3 [shape = 'u8[4096]{0}', space=vmem, size = 0x1000, scoped, tag = 'output window, operand 0']
    #allocation4 [shape = 's32[2]{0}', space=sflag, size = 0x8, scoped, tag = 'scoped memory for tpu_custom_call.1']
    %16 = vsyncpa [#allocation4], 0
    %s17 = scalar_lea.sflag [#allocation4], 1
    %18 = vsyncpa %s17, 0
    loop: start=0, step=1, limit=4
    $region2: #{tpu_custom_call.1} parent=1 // loop_pre_header
      _
    $region3: #{tpu_custom_call.1} parent=1 // loop_header
      %s20 = sphi 0, %s24
      %p21 = scmp.ge.s32.totalorder %s20, 4
      %s27 = sphi 0, %s39
      %s28 = sphi 0, %s35
      %s29 = sphi 0, %s27
      %s30 = sphi 0, %s28
      %s31 = sphi 0, %s29
      %s32 = sphi 0, %s30
      %s44 = sphi 0, %s46
      %s47 = sphi 0, %s44
      %s48 = sphi 0, %s47
      %s64 = sphi 0, %s48
      %s72 = sphi 0, %s74
      %s75 = sphi 0, %s72
      %s76 = sphi 0, %s75
      %s92 = sphi 0, %s76
      %s96 = sphi 0, %s96
      %s98 = sphi 0, %s96
      %s99 = sphi 0, %s98
      %s113 = sphi 0, %s99
      %s121 = sphi 0, %s123
      %s124 = sphi 0, %s121
      %s125 = sphi 0, %s124
      %s141 = sphi 0, %s125
      %s147 = sphi 0, %s149
      %s150 = sphi 0, %s147
      %s151 = sphi 0, %s150
      %s167 = sphi 0, %s151
      %s171 = sphi 0, %s171
      %s173 = sphi 0, %s171
      %s174 = sphi 0, %s173
      %s188 = sphi 0, %s174
      %s192 = sphi 0, %s192
      %s194 = sphi 0, %s192
      %s195 = sphi 0, %s194
      %s209 = sphi 0, %s195
      %s213 = sphi 0, %s213
      %s215 = sphi 0, %s213
      %s216 = sphi 0, %s215
      %s230 = sphi 0, %s216
      %s234 = sphi 0, %s234
      %s236 = sphi 0, %s234
      %s237 = sphi 0, %s236
      %s251 = sphi 0, %s237
      %s255 = sphi 0, %s255
      %s257 = sphi 0, %s255
      %s258 = sphi 0, %s257
      %s272 = sphi 0, %s258
      %s276 = sphi 0, %s276
      %s278 = sphi 0, %s276
      %s279 = sphi 0, %s278
      %s293 = sphi 0, %s279
      %s301 = sphi 0, %s303
      %s304 = sphi 0, %s301
      %s305 = sphi 0, %s304
      %s321 = sphi 0, %s305
    $region4: #{tpu_custom_call.1} parent=1 // loop_header_branch
      %23 = sbr.rel (%p21) target = $region8
    $region5: #{tpu_custom_call.1} parent=1 // loop_body
      %s25 = ssub.s32 %s20, 1
      %s26 = ssub.s32 %s20, 2
      %s33 = sadd.s32 1, %s28
      %p34 = scmp.ge.s32.totalorder %s33, 1
      %s35 = scalar_select %p34, 0, %s33
      %s36 = sadd.s32 1, %s27
      %s37 = scalar_select %p34, %s36, %s27
      %p38 = scmp.ge.s32.totalorder %s37, 2
      %s39 = scalar_select %p38, 0, %s37
      %s40 = ssub.s32 %s27, %s39
      %s41 = ssub.s32 %s28, %s35
      %s42 = sor.u32 %s40, %s41
      %p43 = scmp.eq.s32.totalorder %s42, 0
      %s45 = sadd.s32 %s44, 1
      %s46 = scalar_select %p43, %s44, %s45
      %p49 = pneg %p43
      %p50 = scmp.eq.s32.totalorder %s20, 1
      %p51 = por %p49, %p50
      %p52 = scmp.ne.s32.totalorder %s44, %s47
      %p53 = scmp.eq.s32.totalorder %s20, 0
      %p54 = por %p52, %p53
      %p55 = scmp.ne.s32.totalorder %s44, %s47
      %p56 = scmp.eq.s32.totalorder %s25, 1
      %p57 = por %p55, %p56
      %p58 = scmp.ne.s32.totalorder %s47, %s48
      %p59 = scmp.eq.s32.totalorder %s25, 0
      %p60 = por %p58, %p59
      %p61 = scmp.ne.s32.totalorder %s47, %s48
      %p62 = scmp.eq.s32.totalorder %s26, 1
      %p63 = por %p61, %p62
      %p65 = scmp.ne.s32.totalorder %s48, %s64
      %p66 = scmp.eq.s32.totalorder %s26, 0
      %p67 = por %p65, %p66
      %s68 = ssub.s32 %s27, %s39
      %s69 = ssub.s32 %s28, %s35
      %s70 = sor.u32 %s68, %s69
      %p71 = scmp.eq.s32.totalorder %s70, 0
      %s73 = sadd.s32 %s72, 1
      %s74 = scalar_select %p71, %s72, %s73
      %p77 = pneg %p71
      %p78 = scmp.eq.s32.totalorder %s20, 1
      %p79 = por %p77, %p78
      %p80 = scmp.ne.s32.totalorder %s72, %s75
      %p81 = scmp.eq.s32.totalorder %s20, 0
      %p82 = por %p80, %p81
      %p83 = scmp.ne.s32.totalorder %s72, %s75
      %p84 = scmp.eq.s32.totalorder %s25, 1
      %p85 = por %p83, %p84
      %p86 = scmp.ne.s32.totalorder %s75, %s76
      %p87 = scmp.eq.s32.totalorder %s25, 0
      %p88 = por %p86, %p87
      %p89 = scmp.ne.s32.totalorder %s75, %s76
      %p90 = scmp.eq.s32.totalorder %s26, 1
      %p91 = por %p89, %p90
      %p93 = scmp.ne.s32.totalorder %s76, %s92
      %p94 = scmp.eq.s32.totalorder %s26, 0
      %p95 = por %p93, %p94
      %s97 = sadd.s32 %s96, 1
      %p100 = scmp.eq.s32.totalorder %s20, 1
      %p101 = scmp.ne.s32.totalorder %s96, %s98
      %p102 = scmp.eq.s32.totalorder %s20, 0
      %p103 = por %p101, %p102
      %p104 = scmp.ne.s32.totalorder %s96, %s98
      %p105 = scmp.eq.s32.totalorder %s25, 1
      %p106 = por %p104, %p105
      %p107 = scmp.ne.s32.totalorder %s98, %s99
      %p108 = scmp.eq.s32.totalorder %s25, 0
      %p109 = por %p107, %p108
      %p110 = scmp.ne.s32.totalorder %s98, %s99
      %p111 = scmp.eq.s32.totalorder %s26, 1
      %p112 = por %p110, %p111
      %p114 = scmp.ne.s32.totalorder %s99, %s113
      %p115 = scmp.eq.s32.totalorder %s26, 0
      %p116 = por %p114, %p115
      %s117 = ssub.s32 %s27, %s39
      %s118 = ssub.s32 %s28, %s35
      %s119 = sor.u32 %s117, %s118
      %p120 = scmp.eq.s32.totalorder %s119, 0
      %s122 = sadd.s32 %s121, 1
      %s123 = scalar_select %p120, %s121, %s122
      %p126 = pneg %p120
      %p127 = scmp.eq.s32.totalorder %s20, 1
      %p128 = por %p126, %p127
      %p129 = scmp.ne.s32.totalorder %s121, %s124
      %p130 = scmp.eq.s32.totalorder %s20, 0
      %p131 = por %p129, %p130
      %p132 = scmp.ne.s32.totalorder %s121, %s124
      %p133 = scmp.eq.s32.totalorder %s25, 1
      %p134 = por %p132, %p133
      %p135 = scmp.ne.s32.totalorder %s124, %s125
      %p136 = scmp.eq.s32.totalorder %s25, 0
      %p137 = por %p135, %p136
      %p138 = scmp.ne.s32.totalorder %s124, %s125
      %p139 = scmp.eq.s32.totalorder %s26, 1
      %p140 = por %p138, %p139
      %p142 = scmp.ne.s32.totalorder %s125, %s141
      %p143 = scmp.eq.s32.totalorder %s26, 0
      %p144 = por %p142, %p143
      %s145 = ssub.s32 %s27, %s39
      %p146 = scmp.eq.s32.totalorder %s145, 0
      %s148 = sadd.s32 %s147, 1
      %s149 = scalar_select %p146, %s147, %s148
      %p152 = pneg %p146
      %p153 = scmp.eq.s32.totalorder %s20, 1
      %p154 = por %p152, %p153
      %p155 = scmp.ne.s32.totalorder %s147, %s150
      %p156 = scmp.eq.s32.totalorder %s20, 0
      %p157 = por %p155, %p156
      %p158 = scmp.ne.s32.totalorder %s147, %s150
      %p159 = scmp.eq.s32.totalorder %s25, 1
      %p160 = por %p158, %p159
      %p161 = scmp.ne.s32.totalorder %s150, %s151
      %p162 = scmp.eq.s32.totalorder %s25, 0
      %p163 = por %p161, %p162
      %p164 = scmp.ne.s32.totalorder %s150, %s151
      %p165 = scmp.eq.s32.totalorder %s26, 1
      %p166 = por %p164, %p165
      %p168 = scmp.ne.s32.totalorder %s151, %s167
      %p169 = scmp.eq.s32.totalorder %s26, 0
      %p170 = por %p168, %p169
      %s172 = sadd.s32 %s171, 1
      %p175 = scmp.eq.s32.totalorder %s20, 1
      %p176 = scmp.ne.s32.totalorder %s171, %s173
      %p177 = scmp.eq.s32.totalorder %s20, 0
      %p178 = por %p176, %p177
      %p179 = scmp.ne.s32.totalorder %s171, %s173
      %p180 = scmp.eq.s32.totalorder %s25, 1
      %p181 = por %p179, %p180
      %p182 = scmp.ne.s32.totalorder %s173, %s174
      %p183 = scmp.eq.s32.totalorder %s25, 0
      %p184 = por %p182, %p183
      %p185 = scmp.ne.s32.totalorder %s173, %s174
      %p186 = scmp.eq.s32.totalorder %s26, 1
      %p187 = por %p185, %p186
      %p189 = scmp.ne.s32.totalorder %s174, %s188
      %p190 = scmp.eq.s32.totalorder %s26, 0
      %p191 = por %p189, %p190
      %s193 = sadd.s32 %s192, 1
      %p196 = scmp.eq.s32.totalorder %s20, 1
      %p197 = scmp.ne.s32.totalorder %s192, %s194
      %p198 = scmp.eq.s32.totalorder %s20, 0
      %p199 = por %p197, %p198
      %p200 = scmp.ne.s32.totalorder %s192, %s194
      %p201 = scmp.eq.s32.totalorder %s25, 1
      %p202 = por %p200, %p201
      %p203 = scmp.ne.s32.totalorder %s194, %s195
      %p204 = scmp.eq.s32.totalorder %s25, 0
      %p205 = por %p203, %p204
      %p206 = scmp.ne.s32.totalorder %s194, %s195
      %p207 = scmp.eq.s32.totalorder %s26, 1
      %p208 = por %p206, %p207
      %p210 = scmp.ne.s32.totalorder %s195, %s209
      %p211 = scmp.eq.s32.totalorder %s26, 0
      %p212 = por %p210, %p211
      %s214 = sadd.s32 %s213, 1
      %p217 = scmp.eq.s32.totalorder %s20, 1
      %p218 = scmp.ne.s32.totalorder %s213, %s215
      %p219 = scmp.eq.s32.totalorder %s20, 0
      %p220 = por %p218, %p219
      %p221 = scmp.ne.s32.totalorder %s213, %s215
      %p222 = scmp.eq.s32.totalorder %s25, 1
      %p223 = por %p221, %p222
      %p224 = scmp.ne.s32.totalorder %s215, %s216
      %p225 = scmp.eq.s32.totalorder %s25, 0
      %p226 = por %p224, %p225
      %p227 = scmp.ne.s32.totalorder %s215, %s216
      %p228 = scmp.eq.s32.totalorder %s26, 1
      %p229 = por %p227, %p228
      %p231 = scmp.ne.s32.totalorder %s216, %s230
      %p232 = scmp.eq.s32.totalorder %s26, 0
      %p233 = por %p231, %p232
      %s235 = sadd.s32 %s234, 1
      %p238 = scmp.eq.s32.totalorder %s20, 1
      %p239 = scmp.ne.s32.totalorder %s234, %s236
      %p240 = scmp.eq.s32.totalorder %s20, 0
      %p241 = por %p239, %p240
      %p242 = scmp.ne.s32.totalorder %s234, %s236
      %p243 = scmp.eq.s32.totalorder %s25, 1
      %p244 = por %p242, %p243
      %p245 = scmp.ne.s32.totalorder %s236, %s237
      %p246 = scmp.eq.s32.totalorder %s25, 0
      %p247 = por %p245, %p246
      %p248 = scmp.ne.s32.totalorder %s236, %s237
      %p249 = scmp.eq.s32.totalorder %s26, 1
      %p250 = por %p248, %p249
      %p252 = scmp.ne.s32.totalorder %s237, %s251
      %p253 = scmp.eq.s32.totalorder %s26, 0
      %p254 = por %p252, %p253
      %s256 = sadd.s32 %s255, 1
      %p259 = scmp.eq.s32.totalorder %s20, 1
      %p260 = scmp.ne.s32.totalorder %s255, %s257
      %p261 = scmp.eq.s32.totalorder %s20, 0
      %p262 = por %p260, %p261
      %p263 = scmp.ne.s32.totalorder %s255, %s257
      %p264 = scmp.eq.s32.totalorder %s25, 1
      %p265 = por %p263, %p264
      %p266 = scmp.ne.s32.totalorder %s257, %s258
      %p267 = scmp.eq.s32.totalorder %s25, 0
      %p268 = por %p266, %p267
      %p269 = scmp.ne.s32.totalorder %s257, %s258
      %p270 = scmp.eq.s32.totalorder %s26, 1
      %p271 = por %p269, %p270
      %p273 = scmp.ne.s32.totalorder %s258, %s272
      %p274 = scmp.eq.s32.totalorder %s26, 0
      %p275 = por %p273, %p274
      %s277 = sadd.s32 %s276, 1
      %p280 = scmp.eq.s32.totalorder %s20, 1
      %p281 = scmp.ne.s32.totalorder %s276, %s278
      %p282 = scmp.eq.s32.totalorder %s20, 0
      %p283 = por %p281, %p282
      %p284 = scmp.ne.s32.totalorder %s276, %s278
      %p285 = scmp.eq.s32.totalorder %s25, 1
      %p286 = por %p284, %p285
      %p287 = scmp.ne.s32.totalorder %s278, %s279
      %p288 = scmp.eq.s32.totalorder %s25, 0
      %p289 = por %p287, %p288
      %p290 = scmp.ne.s32.totalorder %s278, %s279
      %p291 = scmp.eq.s32.totalorder %s26, 1
      %p292 = por %p290, %p291
      %p294 = scmp.ne.s32.totalorder %s279, %s293
      %p295 = scmp.eq.s32.totalorder %s26, 0
      %p296 = por %p294, %p295
      %s297 = ssub.s32 %s27, %s39
      %s298 = ssub.s32 %s28, %s35
      %s299 = sor.u32 %s297, %s298
      %p300 = scmp.eq.s32.totalorder %s299, 0
      %s302 = sadd.s32 %s301, 1
      %s303 = scalar_select %p300, %s301, %s302
      %p306 = pneg %p300
      %p307 = scmp.eq.s32.totalorder %s20, 1
      %p308 = por %p306, %p307
      %p309 = scmp.ne.s32.totalorder %s301, %s304
      %p310 = scmp.eq.s32.totalorder %s20, 0
      %p311 = por %p309, %p310
      %p312 = scmp.ne.s32.totalorder %s301, %s304
      %p313 = scmp.eq.s32.totalorder %s25, 1
      %p314 = por %p312, %p313
      %p315 = scmp.ne.s32.totalorder %s304, %s305
      %p316 = scmp.eq.s32.totalorder %s25, 0
      %p317 = por %p315, %p316
      %p318 = scmp.ne.s32.totalorder %s304, %s305
      %p319 = scmp.eq.s32.totalorder %s26, 1
      %p320 = por %p318, %p319
      %p322 = scmp.ne.s32.totalorder %s305, %s321
      %p323 = scmp.eq.s32.totalorder %s26, 0
      %p324 = por %p322, %p323
      %p325 = scmp.le.s32.totalorder 1, %s20
      %p326 = scmp.lt.s32.totalorder %s20, 3
      %p327 = pnand %p325, %p326
      %p328 = pneg %p327
      // Predicated region
      $region9: #{tpu_custom_call.1} parent=5 // pred_check
        _
      $region10: #{tpu_custom_call.1} parent=5 // pred_check_branch
        %330 = sbr.rel (%p327) target = $region12
      $region11: #{tpu_custom_call.1} parent=5 // pred_region
        %s331 = ssub.s32 %s20, 1
        // Predicated region
        $region13: #{tpu_custom_call.1} parent=11 // pred_check
          %p332 = pneg %p109
        $region14: #{tpu_custom_call.1} parent=11 // pred_check_branch
          %334 = sbr.rel (%p332) target = $region16
        $region15: #{tpu_custom_call.1} parent=11 // pred_region
          _
        $region16: #{tpu_custom_call.1} parent=11 // pred_fallthru
          _
        // Predicated region
        $region17: #{tpu_custom_call.1} parent=11 // pred_check
          %p335 = pneg %p184
        $region18: #{tpu_custom_call.1} parent=11 // pred_check_branch
          %337 = sbr.rel (%p335) target = $region20
        $region19: #{tpu_custom_call.1} parent=11 // pred_region
          _
        $region20: #{tpu_custom_call.1} parent=11 // pred_fallthru
          _
        // Predicated region
        $region21: #{tpu_custom_call.1} parent=11 // pred_check
          %p338 = pneg %p205
        $region22: #{tpu_custom_call.1} parent=11 // pred_check_branch
          %340 = sbr.rel (%p338) target = $region24
        $region23: #{tpu_custom_call.1} parent=11 // pred_region
          _
        $region24: #{tpu_custom_call.1} parent=11 // pred_fallthru
          _
        // Predicated region
        $region25: #{tpu_custom_call.1} parent=11 // pred_check
          %p341 = pneg %p226
        $region26: #{tpu_custom_call.1} parent=11 // pred_check_branch
          %343 = sbr.rel (%p341) target = $region28
        $region27: #{tpu_custom_call.1} parent=11 // pred_region
          _
        $region28: #{tpu_custom_call.1} parent=11 // pred_fallthru
          _
        // Predicated region
        $region29: #{tpu_custom_call.1} parent=11 // pred_check
          %p344 = pneg %p247
        $region30: #{tpu_custom_call.1} parent=11 // pred_check_branch
          %346 = sbr.rel (%p344) target = $region32
        $region31: #{tpu_custom_call.1} parent=11 // pred_region
          _
        $region32: #{tpu_custom_call.1} parent=11 // pred_fallthru
          _
        // Predicated region
        $region33: #{tpu_custom_call.1} parent=11 // pred_check
          %p347 = pneg %p268
        $region34: #{tpu_custom_call.1} parent=11 // pred_check_branch
          %349 = sbr.rel (%p347) target = $region36
        $region35: #{tpu_custom_call.1} parent=11 // pred_region
          _
        $region36: #{tpu_custom_call.1} parent=11 // pred_fallthru
          _
        // Predicated region
        $region37: #{tpu_custom_call.1} parent=11 // pred_check
          %p350 = pneg %p289
        $region38: #{tpu_custom_call.1} parent=11 // pred_check_branch
          %352 = sbr.rel (%p350) target = $region40
        $region39: #{tpu_custom_call.1} parent=11 // pred_region
          _
        $region40: #{tpu_custom_call.1} parent=11 // pred_fallthru
          _
      $region12: #{tpu_custom_call.1} parent=5 // pred_fallthru
        _
      %p353 = scmp.lt.s32.totalorder %s20, 2
      // Predicated region
      $region41: #{tpu_custom_call.1} parent=5 // pred_check
        %p354 = pneg %p353
      $region42: #{tpu_custom_call.1} parent=5 // pred_check_branch
        %356 = sbr.rel (%p354) target = $region44
      $region43: #{tpu_custom_call.1} parent=5 // pred_region
        // Predicated region
        $region45: #{tpu_custom_call.1} parent=43 // pred_check
          %p357 = pneg %p54
        $region46: #{tpu_custom_call.1} parent=43 // pred_check_branch
          %359 = sbr.rel (%p357) target = $region48
        $region47: #{tpu_custom_call.1} parent=43 // pred_region
          %s360 = smul.u32 8, %s28
          %p361 = scmp.lt.s32.totalorder %s27, 1
          %s362 = scalar_select %p361, %s27, 1
          %p363 = scmp.lt.s32.totalorder %s360, 7
          %s364 = scalar_select %p363, %s360, 7
          %s365 = smul.addr %s362, 8
          %s366 = sadd.s32 %s364, %s365
          %s367 = smul.addr %s366, 8
          %s368 = scalar_lea.vmem %s0, %s367
          %s369 = smul.u32 8, %s28
        $region48: #{tpu_custom_call.1} parent=43 // pred_fallthru
          _
        // Predicated region
        $region49: #{tpu_custom_call.1} parent=43 // pred_check
          %p370 = pneg %p82
        $region50: #{tpu_custom_call.1} parent=43 // pred_check_branch
          %372 = sbr.rel (%p370) target = $region52
        $region51: #{tpu_custom_call.1} parent=43 // pred_region
          %s373 = smul.u32 8, %s28
          %p374 = scmp.lt.s32.totalorder %s27, 1
          %s375 = scalar_select %p374, %s27, 1
          %p376 = scmp.lt.s32.totalorder %s373, 7
          %s377 = scalar_select %p376, %s373, 7
          %s378 = smul.addr %s375, 8
          %s379 = sadd.s32 %s377, %s378
          %s380 = smul.addr %s379, 8
          %s381 = scalar_lea.vmem %s1, %s380
          %s382 = smul.u32 8, %s28
        $region52: #{tpu_custom_call.1} parent=43 // pred_fallthru
          _
        // Predicated region
        $region53: #{tpu_custom_call.1} parent=43 // pred_check
          %p383 = pneg %p131
        $region54: #{tpu_custom_call.1} parent=43 // pred_check_branch
          %385 = sbr.rel (%p383) target = $region56
        $region55: #{tpu_custom_call.1} parent=43 // pred_region
          %p386 = scmp.lt.s32.totalorder %s27, 1
          %s387 = scalar_select %p386, %s27, 1
          %p388 = scmp.lt.s32.totalorder %s28, 0
          %s389 = scalar_select %p388, %s28, 0
          %s390 = sadd.s32 %s389, %s387
          %s391 = smul.addr %s390, 8
          %s392 = scalar_lea.vmem %s3, %s391
        $region56: #{tpu_custom_call.1} parent=43 // pred_fallthru
          _
        // Predicated region
        $region57: #{tpu_custom_call.1} parent=43 // pred_check
          %p393 = pneg %p157
        $region58: #{tpu_custom_call.1} parent=43 // pred_check_branch
          %395 = sbr.rel (%p393) target = $region60
        $region59: #{tpu_custom_call.1} parent=43 // pred_region
          %p396 = scmp.lt.s32.totalorder %s27, 1
          %s397 = scalar_select %p396, %s27, 1
          %s398 = smul.addr %s397, 8
          %s399 = scalar_lea.vmem %s4, %s398
        $region60: #{tpu_custom_call.1} parent=43 // pred_fallthru
          _
      $region44: #{tpu_custom_call.1} parent=5 // pred_fallthru
        _
      %p400 = scmp.le.s32.totalorder 1, %s20
      %p401 = scmp.lt.s32.totalorder %s20, 3
      %p402 = pnand %p400, %p401
      %p403 = pneg %p402
      // Predicated region
      $region61: #{tpu_custom_call.1} parent=5 // pred_check
        _
      $region62: #{tpu_custom_call.1} parent=5 // pred_check_branch
        %405 = sbr.rel (%p402) target = $region64
      $region63: #{tpu_custom_call.1} parent=5 // pred_region
        %s406 = ssub.s32 %s20, 1
        %s407 = smul.u32 8, %s30
        %p408 = scmp.lt.s32.totalorder %s29, 1
        %s409 = scalar_select %p408, %s29, 1
        %p410 = scmp.lt.s32.totalorder %s407, 7
        %s411 = scalar_select %p410, %s407, 7
        %s412 = smul.addr %s409, 8
        %s413 = sadd.s32 %s411, %s412
        %s414 = smul.addr %s413, 8
        %s415 = scalar_lea.vmem %s0, %s414
        %p416 = pneg %p60
        %p417 = pneg %p57
        %s418 = smul.u32 8, %s30
        %p419 = scmp.lt.s32.totalorder %s29, 1
        %s420 = scalar_select %p419, %s29, 1
        %p421 = scmp.lt.s32.totalorder %s418, 7
        %s422 = scalar_select %p421, %s418, 7
        %s423 = smul.addr %s420, 8
        %s424 = sadd.s32 %s422, %s423
        %s425 = smul.addr %s424, 8
        %s426 = scalar_lea.vmem %s1, %s425
        %p427 = pneg %p88
        %p428 = pneg %p85
        %p429 = pneg %p109
        %p430 = pneg %p106
        %p431 = scmp.lt.s32.totalorder %s29, 1
        %s432 = scalar_select %p431, %s29, 1
        %p433 = scmp.lt.s32.totalorder %s30, 0
        %s434 = scalar_select %p433, %s30, 0
        %s435 = sadd.s32 %s434, %s432
        %s436 = smul.addr %s435, 8
        %s437 = scalar_lea.vmem %s3, %s436
        %p438 = pneg %p137
        %p439 = pneg %p134
        %p440 = scmp.lt.s32.totalorder %s29, 1
        %s441 = scalar_select %p440, %s29, 1
        %s442 = smul.addr %s441, 8
        %s443 = scalar_lea.vmem %s4, %s442
        %p444 = pneg %p163
        %p445 = pneg %p160
        %p446 = pneg %p184
        %p447 = pneg %p181
        %p448 = pneg %p205
        %p449 = pneg %p202
        %p450 = pneg %p226
        %p451 = pneg %p223
        %p452 = pneg %p247
        %p453 = pneg %p244
        %p454 = pneg %p268
        %p455 = pneg %p265
        %p456 = pneg %p289
        %p457 = pneg %p286
        %p458 = pneg %p317
        %p459 = pneg %p314
        %s460 = sand.u32 %s304, 1
        %s461 = scalar_lea.sflag [#allocation4], %s460
        %s462 = sand.u32 %s304, 1
        %s463 = smul.addr %s462, 4
        %s464 = scalar_lea.vmem [#allocation3], %s463
        %s465 = smul.u32 8, %s30
        %p466 = scmp.lt.s32.totalorder %s29, 1
        %s467 = scalar_select %p466, %s29, 1
        %p468 = scmp.lt.s32.totalorder %s465, 7
        %s469 = scalar_select %p468, %s465, 7
        %s470 = smul.addr %s467, 8
        %s471 = sadd.s32 %s469, %s470
        %s472 = smul.addr %s471, 8
        %s473 = scalar_lea.vmem %s0, %s472
        %s474 = smul.u32 8, %s30
        %s475 = smul.u32 8, %s30
        %p476 = scmp.lt.s32.totalorder %s29, 1
        %s477 = scalar_select %p476, %s29, 1
        %p478 = scmp.lt.s32.totalorder %s475, 7
        %s479 = scalar_select %p478, %s475, 7
        %s480 = smul.addr %s477, 8
        %s481 = sadd.s32 %s479, %s480
        %s482 = smul.addr %s481, 8
        %s483 = scalar_lea.vmem %s1, %s482
        %s484 = smul.u32 8, %s30
        %p485 = scmp.lt.s32.totalorder %s29, 1
        %s486 = scalar_select %p485, %s29, 1
        %p487 = scmp.lt.s32.totalorder %s30, 0
        %s488 = scalar_select %p487, %s30, 0
        %s489 = sadd.s32 %s488, %s486
        %s490 = smul.addr %s489, 8
        %s491 = scalar_lea.vmem %s3, %s490
        %p492 = scmp.lt.s32.totalorder %s29, 1
        %s493 = scalar_select %p492, %s29, 1
        %s494 = smul.addr %s493, 8
        %s495 = scalar_lea.vmem %s4, %s494
        %p496 = scmp.eq.s32.totalorder %s30, 0
        // Predicated region
        $region65: #{tpu_custom_call.1} parent=63 // pred_check
          %p497 = pneg %p496
        $region66: #{tpu_custom_call.1} parent=63 // pred_check_branch
          %499 = sbr.rel (%p497) target = $region68
        $region67: #{tpu_custom_call.1} parent=63 // pred_region
          %v500 = vld [vmem:[%s495] sm:$0xff]
          %v501 = vld [vmem:[%s6] sm:$0xff]
          %v502 = vld [vmem:[%s6 + $0x8] sm:$0xff]
          %vm503 = vcmask 130048
          %v505 = vsel %vm503, %v500, 0
          %507 = vmatprep.subr.mxu0 0.0
          %508 = vmatpush1.msra.mxu0 %v501
          %509 = vmatprep.subr.mxu0 0.0
          %510 = vmatpush1.msra.mxu0 %v502
          %511 = vmatprep.subr.mxu0 0.0
          %512 = vmatpush1.msra.mxu0 0.0
          %513 = vmatprep.subr.mxu0 0.0
          %514 = vmatpush1.msra.mxu0 0.0
          %515 = vmatprep.subr.mxu0 0.0
          %516 = vmatpush1.msra.mxu0 0.0
          %517 = vmatprep.subr.mxu0 0.0
          %518 = vmatpush1.msra.mxu0 0.0
          %519 = vmatprep.subr.mxu0 0.0
          %520 = vmatpush1.msra.mxu0 0.0
          %521 = vmatprep.subr.mxu0 0.0
          %522 = vmatpush1.msra.mxu0 0.0
          %523 = vmatprep.subr.mxu0 0.0
          %524 = vmatpush1.msra.mxu0 0.0
          %525 = vmatprep.subr.mxu0 0.0
          %526 = vmatpush1.msra.mxu0 0.0
          %527 = vmatprep.subr.mxu0 0.0
          %528 = vmatpush1.msra.mxu0 0.0
          %529 = vmatprep.subr.mxu0 0.0
          %530 = vmatpush1.msra.mxu0 0.0
          %531 = vmatprep.subr.mxu0 0.0
          %532 = vmatpush1.msra.mxu0 0.0
          %533 = vmatprep.subr.mxu0 0.0
          %534 = vmatpush1.msra.mxu0 0.0
          %535 = vmatprep.subr.mxu0 0.0
          %536 = vmatpush1.msra.mxu0 0.0
          %537 = vmatprep.subr.mxu0 0.0
          %538 = vmatpush1.msra.mxu0 0.0
          %539 = vmatprep.subr.mxu0 0.0
          %540 = vmatpush1.msra.mxu0 0.0
          %541 = vmatprep.subr.mxu0 0.0
          %542 = vmatpush1.msra.mxu0 0.0
          %543 = vmatprep.subr.mxu0 0.0
          %544 = vmatpush1.msra.mxu0 0.0
          %545 = vmatprep.subr.mxu0 0.0
          %546 = vmatpush1.msra.mxu0 0.0
          %547 = vmatprep.subr.mxu0 0.0
          %548 = vmatpush1.msra.mxu0 0.0
          %549 = vmatprep.subr.mxu0 0.0
          %550 = vmatpush1.msra.mxu0 0.0
          %551 = vmatprep.subr.mxu0 0.0
          %552 = vmatpush1.msra.mxu0 0.0
          %553 = vmatprep.subr.mxu0 0.0
          %554 = vmatpush1.msra.mxu0 0.0
          %555 = vmatprep.subr.mxu0 0.0
          %556 = vmatpush1.msra.mxu0 0.0
          %557 = vmatprep.subr.mxu0 0.0
          %558 = vmatpush1.msra.mxu0 0.0
          %559 = vmatprep.subr.mxu0 0.0
          %560 = vmatpush1.msra.mxu0 0.0
          %561 = vmatprep.subr.mxu0 0.0
          %562 = vmatpush1.msra.mxu0 0.0
          %563 = vmatprep.subr.mxu0 0.0
          %564 = vmatpush1.msra.mxu0 0.0
          %565 = vmatprep.subr.mxu0 0.0
          %566 = vmatpush1.msra.mxu0 0.0
          %567 = vmatprep.subr.mxu0 0.0
          %568 = vmatpush1.msra.mxu0 0.0
          %569 = vmatprep.subr.mxu0 0.0
          %570 = vmatpush1.msra.mxu0 0.0
          %571 = vmatprep.mubr.f32.mxu0 0.0
          %572 = vmatmul.mubr.f32.gmra.mrb[0].mxu0 %v505
          %v573 = vpop.f32.mrb[0].mxu0
          %v574 = vadd.f32 0.0, %v573
          %v575 = vpop.f32.mrb[0].mxu0
          %576 = vdwg.mxu0
          %vm577 = vcmask 261120
          %578 = vst.msk [vmem:[#allocation2] sm:$0xff] %vm577, %v574
        $region68: #{tpu_custom_call.1} parent=63 // pred_fallthru
          _
        %v579 = vld [vmem:[%s491] sm:$0xff]
        %v580 = vld [vmem:[%s473] sm:$0xff]
        %v581 = vld [vmem:[%s473 + $0x8] sm:$0xff]
        %v582 = vld [vmem:[%s473 + $0x10] sm:$0xff]
        %v583 = vld [vmem:[%s473 + $0x18] sm:$0xff]
        %v584 = vld [vmem:[%s473 + $0x20] sm:$0xff]
        %v585 = vld [vmem:[%s473 + $0x28] sm:$0xff]
        %v586 = vld [vmem:[%s473 + $0x30] sm:$0xff]
        %v587 = vld [vmem:[%s473 + $0x38] sm:$0xff]
        %v588 = vld [vmem:[%s483] sm:$0xff]
        %v589 = vld [vmem:[%s483 + $0x8] sm:$0xff]
        %v590 = vld [vmem:[%s483 + $0x10] sm:$0xff]
        %v591 = vld [vmem:[%s483 + $0x18] sm:$0xff]
        %v592 = vld [vmem:[%s483 + $0x20] sm:$0xff]
        %v593 = vld [vmem:[%s483 + $0x28] sm:$0xff]
        %v594 = vld [vmem:[%s483 + $0x30] sm:$0xff]
        %v595 = vld [vmem:[%s483 + $0x38] sm:$0xff]
        %v596 = vld [vmem:[%s5] sm:$0xff]
        %v597 = vld [vmem:[%s5 + $0x8] sm:$0xff]
        %vm598 = vcmask 130048
        %v600 = vsel %vm598, %v579, 0
        %602 = vmatprep.subr.mxu0 0.0
        %603 = vmatpush1.msra.mxu0 %v596
        %604 = vmatprep.subr.mxu0 0.0
        %605 = vmatpush1.msra.mxu0 %v597
        %606 = vmatprep.subr.mxu0 0.0
        %607 = vmatpush1.msra.mxu0 0.0
        %608 = vmatprep.subr.mxu0 0.0
        %609 = vmatpush1.msra.mxu0 0.0
        %610 = vmatprep.subr.mxu0 0.0
        %611 = vmatpush1.msra.mxu0 0.0
        %612 = vmatprep.subr.mxu0 0.0
        %613 = vmatpush1.msra.mxu0 0.0
        %614 = vmatprep.subr.mxu0 0.0
        %615 = vmatpush1.msra.mxu0 0.0
        %616 = vmatprep.subr.mxu0 0.0
        %617 = vmatpush1.msra.mxu0 0.0
        %618 = vmatprep.subr.mxu0 0.0
        %619 = vmatpush1.msra.mxu0 0.0
        %620 = vmatprep.subr.mxu0 0.0
        %621 = vmatpush1.msra.mxu0 0.0
        %622 = vmatprep.subr.mxu0 0.0
        %623 = vmatpush1.msra.mxu0 0.0
        %624 = vmatprep.subr.mxu0 0.0
        %625 = vmatpush1.msra.mxu0 0.0
        %626 = vmatprep.subr.mxu0 0.0
        %627 = vmatpush1.msra.mxu0 0.0
        %628 = vmatprep.subr.mxu0 0.0
        %629 = vmatpush1.msra.mxu0 0.0
        %630 = vmatprep.subr.mxu0 0.0
        %631 = vmatpush1.msra.mxu0 0.0
        %632 = vmatprep.subr.mxu0 0.0
        %633 = vmatpush1.msra.mxu0 0.0
        %634 = vmatprep.subr.mxu0 0.0
        %635 = vmatpush1.msra.mxu0 0.0
        %636 = vmatprep.subr.mxu0 0.0
        %637 = vmatpush1.msra.mxu0 0.0
        %638 = vmatprep.subr.mxu0 0.0
        %639 = vmatpush1.msra.mxu0 0.0
        %640 = vmatprep.subr.mxu0 0.0
        %641 = vmatpush1.msra.mxu0 0.0
        %642 = vmatprep.subr.mxu0 0.0
        %643 = vmatpush1.msra.mxu0 0.0
        %644 = vmatprep.subr.mxu0 0.0
        %645 = vmatpush1.msra.mxu0 0.0
        %646 = vmatprep.subr.mxu0 0.0
        %647 = vmatpush1.msra.mxu0 0.0
        %648 = vmatprep.subr.mxu0 0.0
        %649 = vmatpush1.msra.mxu0 0.0
        %650 = vmatprep.subr.mxu0 0.0
        %651 = vmatpush1.msra.mxu0 0.0
        %652 = vmatprep.subr.mxu0 0.0
        %653 = vmatpush1.msra.mxu0 0.0
        %654 = vmatprep.subr.mxu0 0.0
        %655 = vmatpush1.msra.mxu0 0.0
        %656 = vmatprep.subr.mxu0 0.0
        %657 = vmatpush1.msra.mxu0 0.0
        %658 = vmatprep.subr.mxu0 0.0
        %659 = vmatpush1.msra.mxu0 0.0
        %660 = vmatprep.subr.mxu0 0.0
        %661 = vmatpush1.msra.mxu0 0.0
        %662 = vmatprep.subr.mxu0 0.0
        %663 = vmatpush1.msra.mxu0 0.0
        %664 = vmatprep.subr.mxu0 0.0
        %665 = vmatpush1.msra.mxu0 0.0
        %666 = vmatprep.mubr.f32.mxu0 0.0
        %667 = vmatmul.mubr.f32.gmra.mrb[0].mxu0 %v600
        %v668 = vpop.f32.mrb[0].mxu0
        %v669 = vadd.f32 0.0, %v668
        %v670 = vpop.f32.mrb[0].mxu0
        %671 = vdwg.mxu0
        %v672 = vld [vmem:[%s7] sm:$0x7]
        %vm673 = vcmask 23552
        %v675 = vsel %vm673, %v580, 0
        %v678 = vsel %vm673, %v581, 0
        %v681 = vsel %vm673, %v582, 0
        %v684 = vsel %vm673, %v583, 0
        %v687 = vsel %vm673, %v584, 0
        %v690 = vsel %vm673, %v585, 0
        %v693 = vsel %vm673, %v586, 0
        %v696 = vsel %vm673, %v587, 0
        %vm698 = vcmask 1042432
        %v700 = vsel %vm698, %v672, 0
        %702 = vmatprep.subr.mxu0 0.0
        %703 = vmatpush1.msra.mxu0 %v700
        %704 = vmatprep.subr.mxu0 0.0
        %705 = vmatpush1.msra.mxu0 0.0
        %706 = vmatprep.subr.mxu0 0.0
        %707 = vmatpush1.msra.mxu0 0.0
        %708 = vmatprep.subr.mxu0 0.0
        %709 = vmatpush1.msra.mxu0 0.0
        %710 = vmatprep.subr.mxu0 0.0
        %711 = vmatpush1.msra.mxu0 0.0
        %712 = vmatprep.subr.mxu0 0.0
        %713 = vmatpush1.msra.mxu0 0.0
        %714 = vmatprep.subr.mxu0 0.0
        %715 = vmatpush1.msra.mxu0 0.0
        %716 = vmatprep.subr.mxu0 0.0
        %717 = vmatpush1.msra.mxu0 0.0
        %718 = vmatprep.subr.mxu0 0.0
        %719 = vmatpush1.msra.mxu0 0.0
        %720 = vmatprep.subr.mxu0 0.0
        %721 = vmatpush1.msra.mxu0 0.0
        %722 = vmatprep.subr.mxu0 0.0
        %723 = vmatpush1.msra.mxu0 0.0
        %724 = vmatprep.subr.mxu0 0.0
        %725 = vmatpush1.msra.mxu0 0.0
        %726 = vmatprep.subr.mxu0 0.0
        %727 = vmatpush1.msra.mxu0 0.0
        %728 = vmatprep.subr.mxu0 0.0
        %729 = vmatpush1.msra.mxu0 0.0
        %730 = vmatprep.subr.mxu0 0.0
        %731 = vmatpush1.msra.mxu0 0.0
        %732 = vmatprep.subr.mxu0 0.0
        %733 = vmatpush1.msra.mxu0 0.0
        %734 = vmatprep.subr.mxu0 0.0
        %735 = vmatpush1.msra.mxu0 0.0
        %736 = vmatprep.subr.mxu0 0.0
        %737 = vmatpush1.msra.mxu0 0.0
        %738 = vmatprep.subr.mxu0 0.0
        %739 = vmatpush1.msra.mxu0 0.0
        %740 = vmatprep.subr.mxu0 0.0
        %741 = vmatpush1.msra.mxu0 0.0
        %742 = vmatprep.subr.mxu0 0.0
        %743 = vmatpush1.msra.mxu0 0.0
        %744 = vmatprep.subr.mxu0 0.0
        %745 = vmatpush1.msra.mxu0 0.0
        %746 = vmatprep.subr.mxu0 0.0
        %747 = vmatpush1.msra.mxu0 0.0
        %748 = vmatprep.subr.mxu0 0.0
        %749 = vmatpush1.msra.mxu0 0.0
        %750 = vmatprep.subr.mxu0 0.0
        %751 = vmatpush1.msra.mxu0 0.0
        %752 = vmatprep.subr.mxu0 0.0
        %753 = vmatpush1.msra.mxu0 0.0
        %754 = vmatprep.subr.mxu0 0.0
        %755 = vmatpush1.msra.mxu0 0.0
        %756 = vmatprep.subr.mxu0 0.0
        %757 = vmatpush1.msra.mxu0 0.0
        %758 = vmatprep.subr.mxu0 0.0
        %759 = vmatpush1.msra.mxu0 0.0
        %760 = vmatprep.subr.mxu0 0.0
        %761 = vmatpush1.msra.mxu0 0.0
        %762 = vmatprep.subr.mxu0 0.0
        %763 = vmatpush1.msra.mxu0 0.0
        %764 = vmatprep.subr.mxu0 0.0
        %765 = vmatpush1.msra.mxu0 0.0
        %766 = vmatprep.mubr.f32.mxu0 0.0
        %767 = vmatmul.mubr.f32.gmra.mrb[0].mxu0 %v675
        %v768 = vpop.f32.mrb[0].mxu0
        %v769 = vadd.f32 0.0, %v768
        %v770 = vpop.f32.mrb[0].mxu0
        %771 = vmatprep.mubr.f32.mxu0 0.0
        %772 = vmatmul.mubr.f32.gmra.mrb[0].mxu0 %v678
        %v773 = vpop.f32.mrb[0].mxu0
        %v774 = vadd.f32 0.0, %v773
        %v775 = vpop.f32.mrb[0].mxu0
        %776 = vmatprep.mubr.f32.mxu0 0.0
        %777 = vmatmul.mubr.f32.gmra.mrb[0].mxu0 %v681
        %v778 = vpop.f32.mrb[0].mxu0
        %v779 = vadd.f32 0.0, %v778
        %v780 = vpop.f32.mrb[0].mxu0
        %781 = vmatprep.mubr.f32.mxu0 0.0
        %782 = vmatmul.mubr.f32.gmra.mrb[0].mxu0 %v684
        %v783 = vpop.f32.mrb[0].mxu0
        %v784 = vadd.f32 0.0, %v783
        %v785 = vpop.f32.mrb[0].mxu0
        %786 = vmatprep.mubr.f32.mxu0 0.0
        %787 = vmatmul.mubr.f32.gmra.mrb[0].mxu0 %v687
        %v788 = vpop.f32.mrb[0].mxu0
        %v789 = vadd.f32 0.0, %v788
        %v790 = vpop.f32.mrb[0].mxu0
        %791 = vmatprep.mubr.f32.mxu0 0.0
        %792 = vmatmul.mubr.f32.gmra.mrb[0].mxu0 %v690
        %v793 = vpop.f32.mrb[0].mxu0
        %v794 = vadd.f32 0.0, %v793
        %v795 = vpop.f32.mrb[0].mxu0
        %796 = vmatprep.mubr.f32.mxu0 0.0
        %797 = vmatmul.mubr.f32.gmra.mrb[0].mxu0 %v693
        %v798 = vpop.f32.mrb[0].mxu0
        %v799 = vadd.f32 0.0, %v798
        %v800 = vpop.f32.mrb[0].mxu0
        %801 = vmatprep.mubr.f32.mxu0 0.0
        %802 = vmatmul.mubr.f32.gmra.mrb[0].mxu0 %v696
        %v803 = vpop.f32.mrb[0].mxu0
        %v804 = vadd.f32 0.0, %v803
        %v805 = vpop.f32.mrb[0].mxu0
        %806 = vdwg.mxu0
        %v807 = vlaneseq
        %v808 = vand.u32 %v807, 127
        %809 = vset.pattern.permute.xlu0 0
        %810 = vperm.xlu0 %809, %v588
        %v811 = vpop.permute.xlu0 %810
        %812 = vset.pattern.permute.xlu0 0
        %813 = vperm.xlu0 %812, %v589
        %v814 = vpop.permute.xlu0 %813
        %815 = vset.pattern.permute.xlu0 0
        %816 = vperm.xlu0 %815, %v590
        %v817 = vpop.permute.xlu0 %816
        %818 = vset.pattern.permute.xlu0 0
        %819 = vperm.xlu0 %818, %v591
        %v820 = vpop.permute.xlu0 %819
        %821 = vset.pattern.permute.xlu0 0
        %822 = vperm.xlu0 %821, %v592
        %v823 = vpop.permute.xlu0 %822
        %824 = vset.pattern.permute.xlu0 0
        %825 = vperm.xlu0 %824, %v593
        %v826 = vpop.permute.xlu0 %825
        %827 = vset.pattern.permute.xlu0 0
        %828 = vperm.xlu0 %827, %v594
        %v829 = vpop.permute.xlu0 %828
        %830 = vset.pattern.permute.xlu0 0
        %831 = vperm.xlu0 %830, %v595
        %v832 = vpop.permute.xlu0 %831
        %vm833 = vcmp.eq.s32.totalorder %v811, %v808
        %vm834 = vcmp.eq.s32.totalorder %v814, %v808
        %vm835 = vcmp.eq.s32.totalorder %v817, %v808
        %vm836 = vcmp.eq.s32.totalorder %v820, %v808
        %vm837 = vcmp.eq.s32.totalorder %v823, %v808
        %vm838 = vcmp.eq.s32.totalorder %v826, %v808
        %vm839 = vcmp.eq.s32.totalorder %v829, %v808
        %vm840 = vcmp.eq.s32.totalorder %v832, %v808
        %v841 = vsel %vm833, 1, 0
        %v842 = vsel %vm834, 1, 0
        %v843 = vsel %vm835, 1, 0
        %v844 = vsel %vm836, 1, 0
        %v845 = vsel %vm837, 1, 0
        %v846 = vsel %vm838, 1, 0
        %v847 = vsel %vm839, 1, 0
        %v848 = vsel %vm840, 1, 0
        %v849 = vcvt.s32.f32 %v841
        %v850 = vcvt.s32.f32 %v842
        %v851 = vcvt.s32.f32 %v843
        %v852 = vcvt.s32.f32 %v844
        %v853 = vcvt.s32.f32 %v845
        %v854 = vcvt.s32.f32 %v846
        %v855 = vcvt.s32.f32 %v847
        %v856 = vcvt.s32.f32 %v848
        %v857 = vld [vmem:[#allocation2] sm:$0xff]
        %vm858 = vcmask 64512
        %v860 = vsel %vm858, %v849, 0
        %v863 = vsel %vm858, %v850, 0
        %v866 = vsel %vm858, %v851, 0
        %v869 = vsel %vm858, %v852, 0
        %v872 = vsel %vm858, %v853, 0
        %v875 = vsel %vm858, %v854, 0
        %v878 = vsel %vm858, %v855, 0
        %v881 = vsel %vm858, %v856, 0
        %883 = vmatprep.subr.mxu0 0.0
        %884 = vmatpush1.msra.mxu0 %v857
        %885 = vmatprep.subr.mxu0 0.0
        %886 = vmatpush1.msra.mxu0 0.0
        %887 = vmatprep.subr.mxu0 0.0
        %888 = vmatpush1.msra.mxu0 0.0
        %889 = vmatprep.subr.mxu0 0.0
        %890 = vmatpush1.msra.mxu0 0.0
        %891 = vmatprep.subr.mxu0 0.0
        %892 = vmatpush1.msra.mxu0 0.0
        %893 = vmatprep.subr.mxu0 0.0
        %894 = vmatpush1.msra.mxu0 0.0
        %895 = vmatprep.subr.mxu0 0.0
        %896 = vmatpush1.msra.mxu0 0.0
        %897 = vmatprep.subr.mxu0 0.0
        %898 = vmatpush1.msra.mxu0 0.0
        %899 = vmatprep.subr.mxu0 0.0
        %900 = vmatpush1.msra.mxu0 0.0
        %901 = vmatprep.subr.mxu0 0.0
        %902 = vmatpush1.msra.mxu0 0.0
        %903 = vmatprep.subr.mxu0 0.0
        %904 = vmatpush1.msra.mxu0 0.0
        %905 = vmatprep.subr.mxu0 0.0
        %906 = vmatpush1.msra.mxu0 0.0
        %907 = vmatprep.subr.mxu0 0.0
        %908 = vmatpush1.msra.mxu0 0.0
        %909 = vmatprep.subr.mxu0 0.0
        %910 = vmatpush1.msra.mxu0 0.0
        %911 = vmatprep.subr.mxu0 0.0
        %912 = vmatpush1.msra.mxu0 0.0
        %913 = vmatprep.subr.mxu0 0.0
        %914 = vmatpush1.msra.mxu0 0.0
        %915 = vmatprep.subr.mxu0 0.0
        %916 = vmatpush1.msra.mxu0 0.0
        %917 = vmatprep.subr.mxu0 0.0
        %918 = vmatpush1.msra.mxu0 0.0
        %919 = vmatprep.subr.mxu0 0.0
        %920 = vmatpush1.msra.mxu0 0.0
        %921 = vmatprep.subr.mxu0 0.0
        %922 = vmatpush1.msra.mxu0 0.0
        %923 = vmatprep.subr.mxu0 0.0
        %924 = vmatpush1.msra.mxu0 0.0
        %925 = vmatprep.subr.mxu0 0.0
        %926 = vmatpush1.msra.mxu0 0.0
        %927 = vmatprep.subr.mxu0 0.0
        %928 = vmatpush1.msra.mxu0 0.0
        %929 = vmatprep.subr.mxu0 0.0
        %930 = vmatpush1.msra.mxu0 0.0
        %931 = vmatprep.subr.mxu0 0.0
        %932 = vmatpush1.msra.mxu0 0.0
        %933 = vmatprep.subr.mxu0 0.0
        %934 = vmatpush1.msra.mxu0 0.0
        %935 = vmatprep.subr.mxu0 0.0
        %936 = vmatpush1.msra.mxu0 0.0
        %937 = vmatprep.subr.mxu0 0.0
        %938 = vmatpush1.msra.mxu0 0.0
        %939 = vmatprep.subr.mxu0 0.0
        %940 = vmatpush1.msra.mxu0 0.0
        %941 = vmatprep.subr.mxu0 0.0
        %942 = vmatpush1.msra.mxu0 0.0
        %943 = vmatprep.subr.mxu0 0.0
        %944 = vmatpush1.msra.mxu0 0.0
        %945 = vmatprep.subr.mxu0 0.0
        %946 = vmatpush1.msra.mxu0 0.0
        %947 = vmatprep.mubr.f32.mxu0 0.0
        %948 = vmatmul.mubr.f32.gmra.mrb[0].mxu0 %v860
        %v949 = vpop.f32.mrb[0].mxu0
        %v950 = vadd.f32 0.0, %v949
        %v951 = vpop.f32.mrb[0].mxu0
        %952 = vmatprep.mubr.f32.mxu0 0.0
        %953 = vmatmul.mubr.f32.gmra.mrb[0].mxu0 %v863
        %v954 = vpop.f32.mrb[0].mxu0
        %v955 = vadd.f32 0.0, %v954
        %v956 = vpop.f32.mrb[0].mxu0
        %957 = vmatprep.mubr.f32.mxu0 0.0
        %958 = vmatmul.mubr.f32.gmra.mrb[0].mxu0 %v866
        %v959 = vpop.f32.mrb[0].mxu0
        %v960 = vadd.f32 0.0, %v959
        %v961 = vpop.f32.mrb[0].mxu0
        %962 = vmatprep.mubr.f32.mxu0 0.0
        %963 = vmatmul.mubr.f32.gmra.mrb[0].mxu0 %v869
        %v964 = vpop.f32.mrb[0].mxu0
        %v965 = vadd.f32 0.0, %v964
        %v966 = vpop.f32.mrb[0].mxu0
        %967 = vmatprep.mubr.f32.mxu0 0.0
        %968 = vmatmul.mubr.f32.gmra.mrb[0].mxu0 %v872
        %v969 = vpop.f32.mrb[0].mxu0
        %v970 = vadd.f32 0.0, %v969
        %v971 = vpop.f32.mrb[0].mxu0
        %972 = vmatprep.mubr.f32.mxu0 0.0
        %973 = vmatmul.mubr.f32.gmra.mrb[0].mxu0 %v875
        %v974 = vpop.f32.mrb[0].mxu0
        %v975 = vadd.f32 0.0, %v974
        %v976 = vpop.f32.mrb[0].mxu0
        %977 = vmatprep.mubr.f32.mxu0 0.0
        %978 = vmatmul.mubr.f32.gmra.mrb[0].mxu0 %v878
        %v979 = vpop.f32.mrb[0].mxu0
        %v980 = vadd.f32 0.0, %v979
        %v981 = vpop.f32.mrb[0].mxu0
        %982 = vmatprep.mubr.f32.mxu0 0.0
        %983 = vmatmul.mubr.f32.gmra.mrb[0].mxu0 %v881
        %v984 = vpop.f32.mrb[0].mxu0
        %v985 = vadd.f32 0.0, %v984
        %v986 = vpop.f32.mrb[0].mxu0
        %987 = vdwg.mxu0
        %v988 = vld [vmem:[%s8] sm:$0x1]
        %v990 = vlaneseq
        %v991 = vshrl.u32 %v990, 7
        %v992 = vsub.s32 0, %v991
        %v993 = vrot.slane %v988, %v992
        %v995 = vadd.f32 %v669, %v993
        %v996 = vld [vmem:[%s9] sm:$0x1]
        %v998 = vlaneseq
        %v999 = vshrl.u32 %v998, 7
        %v1000 = vsub.s32 0, %v999
        %v1001 = vrot.slane %v996, %v1000
        %v1003 = vadd.f32 %v669, %v1001
        %v1004 = vmul.f32 %v1003, 0.5
        %v1005 = vld [vmem:[%s2] sm:$0xff]
        %v1006 = vld [vmem:[%s2 + $0x8] sm:$0xff]
        %v1007 = vld [vmem:[%s2 + $0x10] sm:$0xff]
        %v1008 = vld [vmem:[%s2 + $0x18] sm:$0xff]
        %v1009 = vld [vmem:[%s2 + $0x20] sm:$0xff]
        %v1010 = vld [vmem:[%s2 + $0x28] sm:$0xff]
        %v1011 = vld [vmem:[%s2 + $0x30] sm:$0xff]
        %v1012 = vld [vmem:[%s2 + $0x38] sm:$0xff]
        %v1014 = vsel %vm858, %v1005, 0
        %v1017 = vsel %vm858, %v1006, 0
        %v1020 = vsel %vm858, %v1007, 0
        %v1023 = vsel %vm858, %v1008, 0
        %v1026 = vsel %vm858, %v1009, 0
        %v1029 = vsel %vm858, %v1010, 0
        %v1032 = vsel %vm858, %v1011, 0
        %v1035 = vsel %vm858, %v1012, 0
        %1037 = vmatprep.subr.mxu0 0.0
        %1038 = vmatpush1.msra.mxu0 %v995
        %1039 = vmatprep.subr.mxu0 0.0
        %1040 = vmatpush1.msra.mxu0 0.0
        %1041 = vmatprep.subr.mxu0 0.0
        %1042 = vmatpush1.msra.mxu0 0.0
        %1043 = vmatprep.subr.mxu0 0.0
        %1044 = vmatpush1.msra.mxu0 0.0
        %1045 = vmatprep.subr.mxu0 0.0
        %1046 = vmatpush1.msra.mxu0 0.0
        %1047 = vmatprep.subr.mxu0 0.0
        %1048 = vmatpush1.msra.mxu0 0.0
        %1049 = vmatprep.subr.mxu0 0.0
        %1050 = vmatpush1.msra.mxu0 0.0
        %1051 = vmatprep.subr.mxu0 0.0
        %1052 = vmatpush1.msra.mxu0 0.0
        %1053 = vmatprep.subr.mxu0 0.0
        %1054 = vmatpush1.msra.mxu0 0.0
        %1055 = vmatprep.subr.mxu0 0.0
        %1056 = vmatpush1.msra.mxu0 0.0
        %1057 = vmatprep.subr.mxu0 0.0
        %1058 = vmatpush1.msra.mxu0 0.0
        %1059 = vmatprep.subr.mxu0 0.0
        %1060 = vmatpush1.msra.mxu0 0.0
        %1061 = vmatprep.subr.mxu0 0.0
        %1062 = vmatpush1.msra.mxu0 0.0
        %1063 = vmatprep.subr.mxu0 0.0
        %1064 = vmatpush1.msra.mxu0 0.0
        %1065 = vmatprep.subr.mxu0 0.0
        %1066 = vmatpush1.msra.mxu0 0.0
        %1067 = vmatprep.subr.mxu0 0.0
        %1068 = vmatpush1.msra.mxu0 0.0
        %1069 = vmatprep.subr.mxu0 0.0
        %1070 = vmatpush1.msra.mxu0 0.0
        %1071 = vmatprep.subr.mxu0 0.0
        %1072 = vmatpush1.msra.mxu0 0.0
        %1073 = vmatprep.subr.mxu0 0.0
        %1074 = vmatpush1.msra.mxu0 0.0
        %1075 = vmatprep.subr.mxu0 0.0
        %1076 = vmatpush1.msra.mxu0 0.0
        %1077 = vmatprep.subr.mxu0 0.0
        %1078 = vmatpush1.msra.mxu0 0.0
        %1079 = vmatprep.subr.mxu0 0.0
        %1080 = vmatpush1.msra.mxu0 0.0
        %1081 = vmatprep.subr.mxu0 0.0
        %1082 = vmatpush1.msra.mxu0 0.0
        %1083 = vmatprep.subr.mxu0 0.0
        %1084 = vmatpush1.msra.mxu0 0.0
        %1085 = vmatprep.subr.mxu0 0.0
        %1086 = vmatpush1.msra.mxu0 0.0
        %1087 = vmatprep.subr.mxu0 0.0
        %1088 = vmatpush1.msra.mxu0 0.0
        %1089 = vmatprep.subr.mxu0 0.0
        %1090 = vmatpush1.msra.mxu0 0.0
        %1091 = vmatprep.subr.mxu0 0.0
        %1092 = vmatpush1.msra.mxu0 0.0
        %1093 = vmatprep.subr.mxu0 0.0
        %1094 = vmatpush1.msra.mxu0 0.0
        %1095 = vmatprep.subr.mxu0 0.0
        %1096 = vmatpush1.msra.mxu0 0.0
        %1097 = vmatprep.subr.mxu0 0.0
        %1098 = vmatpush1.msra.mxu0 0.0
        %1099 = vmatprep.subr.mxu0 0.0
        %1100 = vmatpush1.msra.mxu0 0.0
        %1101 = vmatprep.mubr.f32.mxu0 0.0
        %1102 = vmatmul.mubr.f32.gmra.mrb[0].mxu0 %v1014
        %v1103 = vpop.f32.mrb[0].mxu0
        %v1104 = vadd.f32 0.0, %v1103
        %v1105 = vpop.f32.mrb[0].mxu0
        %1106 = vmatprep.mubr.f32.mxu0 0.0
        %1107 = vmatmul.mubr.f32.gmra.mrb[0].mxu0 %v1017
        %v1108 = vpop.f32.mrb[0].mxu0
        %v1109 = vadd.f32 0.0, %v1108
        %v1110 = vpop.f32.mrb[0].mxu0
        %1111 = vmatprep.mubr.f32.mxu0 0.0
        %1112 = vmatmul.mubr.f32.gmra.mrb[0].mxu0 %v1020
        %v1113 = vpop.f32.mrb[0].mxu0
        %v1114 = vadd.f32 0.0, %v1113
        %v1115 = vpop.f32.mrb[0].mxu0
        %1116 = vmatprep.mubr.f32.mxu0 0.0
        %1117 = vmatmul.mubr.f32.gmra.mrb[0].mxu0 %v1023
        %v1118 = vpop.f32.mrb[0].mxu0
        %v1119 = vadd.f32 0.0, %v1118
        %v1120 = vpop.f32.mrb[0].mxu0
        %1121 = vmatprep.mubr.f32.mxu0 0.0
        %1122 = vmatmul.mubr.f32.gmra.mrb[0].mxu0 %v1026
        %v1123 = vpop.f32.mrb[0].mxu0
        %v1124 = vadd.f32 0.0, %v1123
        %v1125 = vpop.f32.mrb[0].mxu0
        %1126 = vmatprep.mubr.f32.mxu0 0.0
        %1127 = vmatmul.mubr.f32.gmra.mrb[0].mxu0 %v1029
        %v1128 = vpop.f32.mrb[0].mxu0
        %v1129 = vadd.f32 0.0, %v1128
        %v1130 = vpop.f32.mrb[0].mxu0
        %1131 = vmatprep.mubr.f32.mxu0 0.0
        %1132 = vmatmul.mubr.f32.gmra.mrb[0].mxu0 %v1032
        %v1133 = vpop.f32.mrb[0].mxu0
        %v1134 = vadd.f32 0.0, %v1133
        %v1135 = vpop.f32.mrb[0].mxu0
        %1136 = vmatprep.mubr.f32.mxu0 0.0
        %1137 = vmatmul.mubr.f32.gmra.mrb[0].mxu0 %v1035
        %v1138 = vpop.f32.mrb[0].mxu0
        %v1139 = vadd.f32 0.0, %v1138
        %v1140 = vpop.f32.mrb[0].mxu0
        %1141 = vdwg.mxu0
        %1142 = vmatprep.subr.mxu0 0.0
        %1143 = vmatpush1.msra.mxu0 %v1004
        %1144 = vmatprep.subr.mxu0 0.0
        %1145 = vmatpush1.msra.mxu0 0.0
        %1146 = vmatprep.subr.mxu0 0.0
        %1147 = vmatpush1.msra.mxu0 0.0
        %1148 = vmatprep.subr.mxu0 0.0
        %1149 = vmatpush1.msra.mxu0 0.0
        %1150 = vmatprep.subr.mxu0 0.0
        %1151 = vmatpush1.msra.mxu0 0.0
        %1152 = vmatprep.subr.mxu0 0.0
        %1153 = vmatpush1.msra.mxu0 0.0
        %1154 = vmatprep.subr.mxu0 0.0
        %1155 = vmatpush1.msra.mxu0 0.0
        %1156 = vmatprep.subr.mxu0 0.0
        %1157 = vmatpush1.msra.mxu0 0.0
        %1158 = vmatprep.subr.mxu0 0.0
        %1159 = vmatpush1.msra.mxu0 0.0
        %1160 = vmatprep.subr.mxu0 0.0
        %1161 = vmatpush1.msra.mxu0 0.0
        %1162 = vmatprep.subr.mxu0 0.0
        %1163 = vmatpush1.msra.mxu0 0.0
        %1164 = vmatprep.subr.mxu0 0.0
        %1165 = vmatpush1.msra.mxu0 0.0
        %1166 = vmatprep.subr.mxu0 0.0
        %1167 = vmatpush1.msra.mxu0 0.0
        %1168 = vmatprep.subr.mxu0 0.0
        %1169 = vmatpush1.msra.mxu0 0.0
        %1170 = vmatprep.subr.mxu0 0.0
        %1171 = vmatpush1.msra.mxu0 0.0
        %1172 = vmatprep.subr.mxu0 0.0
        %1173 = vmatpush1.msra.mxu0 0.0
        %1174 = vmatprep.subr.mxu0 0.0
        %1175 = vmatpush1.msra.mxu0 0.0
        %1176 = vmatprep.subr.mxu0 0.0
        %1177 = vmatpush1.msra.mxu0 0.0
        %1178 = vmatprep.subr.mxu0 0.0
        %1179 = vmatpush1.msra.mxu0 0.0
        %1180 = vmatprep.subr.mxu0 0.0
        %1181 = vmatpush1.msra.mxu0 0.0
        %1182 = vmatprep.subr.mxu0 0.0
        %1183 = vmatpush1.msra.mxu0 0.0
        %1184 = vmatprep.subr.mxu0 0.0
        %1185 = vmatpush1.msra.mxu0 0.0
        %1186 = vmatprep.subr.mxu0 0.0
        %1187 = vmatpush1.msra.mxu0 0.0
        %1188 = vmatprep.subr.mxu0 0.0
        %1189 = vmatpush1.msra.mxu0 0.0
        %1190 = vmatprep.subr.mxu0 0.0
        %1191 = vmatpush1.msra.mxu0 0.0
        %1192 = vmatprep.subr.mxu0 0.0
        %1193 = vmatpush1.msra.mxu0 0.0
        %1194 = vmatprep.subr.mxu0 0.0
        %1195 = vmatpush1.msra.mxu0 0.0
        %1196 = vmatprep.subr.mxu0 0.0
        %1197 = vmatpush1.msra.mxu0 0.0
        %1198 = vmatprep.subr.mxu0 0.0
        %1199 = vmatpush1.msra.mxu0 0.0
        %1200 = vmatprep.subr.mxu0 0.0
        %1201 = vmatpush1.msra.mxu0 0.0
        %1202 = vmatprep.subr.mxu0 0.0
        %1203 = vmatpush1.msra.mxu0 0.0
        %1204 = vmatprep.subr.mxu0 0.0
        %1205 = vmatpush1.msra.mxu0 0.0
        %1206 = vmatprep.mubr.f32.mxu0 0.0
        %1207 = vmatmul.mubr.f32.gmra.mrb[0].mxu0 %v1014
        %v1208 = vpop.f32.mrb[0].mxu0
        %v1209 = vadd.f32 0.0, %v1208
        %v1210 = vpop.f32.mrb[0].mxu0
        %1211 = vmatprep.mubr.f32.mxu0 0.0
        %1212 = vmatmul.mubr.f32.gmra.mrb[0].mxu0 %v1017
        %v1213 = vpop.f32.mrb[0].mxu0
        %v1214 = vadd.f32 0.0, %v1213
        %v1215 = vpop.f32.mrb[0].mxu0
        %1216 = vmatprep.mubr.f32.mxu0 0.0
        %1217 = vmatmul.mubr.f32.gmra.mrb[0].mxu0 %v1020
        %v1218 = vpop.f32.mrb[0].mxu0
        %v1219 = vadd.f32 0.0, %v1218
        %v1220 = vpop.f32.mrb[0].mxu0
        %1221 = vmatprep.mubr.f32.mxu0 0.0
        %1222 = vmatmul.mubr.f32.gmra.mrb[0].mxu0 %v1023
        %v1223 = vpop.f32.mrb[0].mxu0
        %v1224 = vadd.f32 0.0, %v1223
        %v1225 = vpop.f32.mrb[0].mxu0
        %1226 = vmatprep.mubr.f32.mxu0 0.0
        %1227 = vmatmul.mubr.f32.gmra.mrb[0].mxu0 %v1026
        %v1228 = vpop.f32.mrb[0].mxu0
        %v1229 = vadd.f32 0.0, %v1228
        %v1230 = vpop.f32.mrb[0].mxu0
        %1231 = vmatprep.mubr.f32.mxu0 0.0
        %1232 = vmatmul.mubr.f32.gmra.mrb[0].mxu0 %v1029
        %v1233 = vpop.f32.mrb[0].mxu0
        %v1234 = vadd.f32 0.0, %v1233
        %v1235 = vpop.f32.mrb[0].mxu0
        %1236 = vmatprep.mubr.f32.mxu0 0.0
        %1237 = vmatmul.mubr.f32.gmra.mrb[0].mxu0 %v1032
        %v1238 = vpop.f32.mrb[0].mxu0
        %v1239 = vadd.f32 0.0, %v1238
        %v1240 = vpop.f32.mrb[0].mxu0
        %1241 = vmatprep.mubr.f32.mxu0 0.0
        %1242 = vmatmul.mubr.f32.gmra.mrb[0].mxu0 %v1035
        %v1243 = vpop.f32.mrb[0].mxu0
        %v1244 = vadd.f32 0.0, %v1243
        %v1245 = vpop.f32.mrb[0].mxu0
        %1246 = vdwg.mxu0
        %v1247 = vmul.f32 %v950, %v1104
        %v1248 = vmul.f32 %v955, %v1109
        %v1249 = vmul.f32 %v960, %v1114
        %v1250 = vmul.f32 %v965, %v1119
        %v1251 = vmul.f32 %v970, %v1124
        %v1252 = vmul.f32 %v975, %v1129
        %v1253 = vmul.f32 %v980, %v1134
        %v1254 = vmul.f32 %v985, %v1139
        %v1255 = vmul.f32 %v769, %v1209
        %v1256 = vmul.f32 %v774, %v1214
        %v1257 = vmul.f32 %v779, %v1219
        %v1258 = vmul.f32 %v784, %v1224
        %v1259 = vmul.f32 %v789, %v1229
        %v1260 = vmul.f32 %v794, %v1234
        %v1261 = vmul.f32 %v799, %v1239
        %v1262 = vmul.f32 %v804, %v1244
        %v1263 = vadd.f32 %v1247, %v1255
        %v1264 = vadd.f32 %v1248, %v1256
        %v1265 = vadd.f32 %v1249, %v1257
        %v1266 = vadd.f32 %v1250, %v1258
        %v1267 = vadd.f32 %v1251, %v1259
        %v1268 = vadd.f32 %v1252, %v1260
        %v1269 = vadd.f32 %v1253, %v1261
        %v1270 = vadd.f32 %v1254, %v1262
        %v1271 = vld [vmem:[%s10] sm:$0xf]
        %vm1272 = vcmask 261120
        %v1274 = vsel %vm1272, %v1271, 0
        %v1277 = vsel %vm1272, %v1263, 0
        %v1280 = vsel %vm1272, %v1264, 0
        %v1283 = vsel %vm1272, %v1265, 0
        %v1286 = vsel %vm1272, %v1266, 0
        %v1289 = vsel %vm1272, %v1267, 0
        %v1292 = vsel %vm1272, %v1268, 0
        %v1295 = vsel %vm1272, %v1269, 0
        %v1298 = vsel %vm1272, %v1270, 0
        %1300 = vmatprep.subr.mxu0 0.0
        %1301 = vmatpush1.xpose.msra.mxu0 %v1277
        %1302 = vmatprep.subr.mxu0 0.0
        %1303 = vmatpush1.xpose.msra.mxu0 %v1280
        %1304 = vmatprep.subr.mxu0 0.0
        %1305 = vmatpush1.xpose.msra.mxu0 %v1283
        %1306 = vmatprep.subr.mxu0 0.0
        %1307 = vmatpush1.xpose.msra.mxu0 %v1286
        %1308 = vmatprep.subr.mxu0 0.0
        %1309 = vmatpush1.xpose.msra.mxu0 %v1289
        %1310 = vmatprep.subr.mxu0 0.0
        %1311 = vmatpush1.xpose.msra.mxu0 %v1292
        %1312 = vmatprep.subr.mxu0 0.0
        %1313 = vmatpush1.xpose.msra.mxu0 %v1295
        %1314 = vmatprep.subr.mxu0 0.0
        %1315 = vmatpush1.xpose.msra.mxu0 %v1298
        %1316 = vmatprep.subr.mxu0 0.0
        %1317 = vmatpush1.xpose.msra.mxu0 0.0
        %1318 = vmatprep.subr.mxu0 0.0
        %1319 = vmatpush1.xpose.msra.mxu0 0.0
        %1320 = vmatprep.subr.mxu0 0.0
        %1321 = vmatpush1.xpose.msra.mxu0 0.0
        %1322 = vmatprep.subr.mxu0 0.0
        %1323 = vmatpush1.xpose.msra.mxu0 0.0
        %1324 = vmatprep.subr.mxu0 0.0
        %1325 = vmatpush1.xpose.msra.mxu0 0.0
        %1326 = vmatprep.subr.mxu0 0.0
        %1327 = vmatpush1.xpose.msra.mxu0 0.0
        %1328 = vmatprep.subr.mxu0 0.0
        %1329 = vmatpush1.xpose.msra.mxu0 0.0
        %1330 = vmatprep.subr.mxu0 0.0
        %1331 = vmatpush1.xpose.msra.mxu0 0.0
        %1332 = vmatprep.subr.mxu0 0.0
        %1333 = vmatpush1.xpose.msra.mxu0 0.0
        %1334 = vmatprep.subr.mxu0 0.0
        %1335 = vmatpush1.xpose.msra.mxu0 0.0
        %1336 = vmatprep.subr.mxu0 0.0
        %1337 = vmatpush1.xpose.msra.mxu0 0.0
        %1338 = vmatprep.subr.mxu0 0.0
        %1339 = vmatpush1.xpose.msra.mxu0 0.0
        %1340 = vmatprep.subr.mxu0 0.0
        %1341 = vmatpush1.xpose.msra.mxu0 0.0
        %1342 = vmatprep.subr.mxu0 0.0
        %1343 = vmatpush1.xpose.msra.mxu0 0.0
        %1344 = vmatprep.subr.mxu0 0.0
        %1345 = vmatpush1.xpose.msra.mxu0 0.0
        %1346 = vmatprep.subr.mxu0 0.0
        %1347 = vmatpush1.xpose.msra.mxu0 0.0
        %1348 = vmatprep.subr.mxu0 0.0
        %1349 = vmatpush1.xpose.msra.mxu0 0.0
        %1350 = vmatprep.subr.mxu0 0.0
        %1351 = vmatpush1.xpose.msra.mxu0 0.0
        %1352 = vmatprep.subr.mxu0 0.0
        %1353 = vmatpush1.xpose.msra.mxu0 0.0
        %1354 = vmatprep.subr.mxu0 0.0
        %1355 = vmatpush1.xpose.msra.mxu0 0.0
        %1356 = vmatprep.subr.mxu0 0.0
        %1357 = vmatpush1.xpose.msra.mxu0 0.0
        %1358 = vmatprep.subr.mxu0 0.0
        %1359 = vmatpush1.xpose.msra.mxu0 0.0
        %1360 = vmatprep.subr.mxu0 0.0
        %1361 = vmatpush1.xpose.msra.mxu0 0.0
        %1362 = vmatprep.subr.mxu0 0.0
        %1363 = vmatpush1.xpose.msra.mxu0 0.0
        %1364 = vmatprep.mubr.f32.mxu0 0.0
        %1365 = vmatmul.mubr.f32.gmra.mrb[0].mxu0 %v1274
        %v1366 = vpop.f32.mrb[0].mxu0
        %v1367 = vadd.f32 0.0, %v1366
        %v1368 = vpop.f32.mrb[0].mxu0
        %1369 = vdwg.mxu0
        %vm1370 = vcmask 519168
        %1371 = vst.msk [vmem:[%s464] sm:$0xf] %vm1370, %v1367
        %s1372 = sand.u32 %s304, 1
        %s1373 = scalar_lea.sflag [#allocation4], %s1372
        %s1374 = sand.u32 %s304, 1
        %s1375 = smul.addr %s1374, 4
        %s1376 = scalar_lea.vmem [#allocation3], %s1375
        // Predicated region
        $region69: #{tpu_custom_call.1} parent=63 // pred_check
          %p1377 = pneg %p314
        $region70: #{tpu_custom_call.1} parent=63 // pred_check_branch
          %1379 = sbr.rel (%p1377) target = $region72
        $region71: #{tpu_custom_call.1} parent=63 // pred_region
          %s1381 = ssub.s32 64, 64
          %1382 = vsyncadd %s1373, %s1381
          %s1383 = sadd.s32 %s30, %s29
          %s1384 = smul.addr %s1383, 64
          %s1385 = scalar_lea.hbm %s11, %s1384
          %s1387 = sshll.u32 %s1376, 4
          %s1388 = int_to_ptr.vmem [resolvable:$true] %s1387
          %1390 = dma.vmem_to_hbm [thread:$0]  %s1388, 64, %s1385, %s1373
        $region72: #{tpu_custom_call.1} parent=63 // pred_fallthru
          _
      $region64: #{tpu_custom_call.1} parent=5 // pred_fallthru
        _
      %p1391 = scmp.le.s32.totalorder 2, %s20
      // Predicated region
      $region73: #{tpu_custom_call.1} parent=5 // pred_check
        %p1392 = pneg %p1391
      $region74: #{tpu_custom_call.1} parent=5 // pred_check_branch
        %1394 = sbr.rel (%p1392) target = $region76
      $region75: #{tpu_custom_call.1} parent=5 // pred_region
        %s1395 = ssub.s32 %s20, 2
        // Predicated region
        $region77: #{tpu_custom_call.1} parent=75 // pred_check
          %p1396 = pneg %p320
        $region78: #{tpu_custom_call.1} parent=75 // pred_check_branch
          %1398 = sbr.rel (%p1396) target = $region80
        $region79: #{tpu_custom_call.1} parent=75 // pred_region
          %s1399 = sand.u32 %s305, 1
          %s1400 = scalar_lea.sflag [#allocation4], %s1399
          %s1401 = sand.u32 %s305, 1
          %s1402 = smul.addr %s1401, 4
          %s1403 = scalar_lea.vmem [#allocation3], %s1402
          %1404 = dma.done %s1400, 64
        $region80: #{tpu_custom_call.1} parent=75 // pred_fallthru
          _
      $region76: #{tpu_custom_call.1} parent=5 // pred_fallthru
        _
    $region6: #{tpu_custom_call.1} parent=1 // loop_footer
      %s24 = sadd.s32 1, %s20
    $region7: #{tpu_custom_call.1} parent=1 // loop_footer_branch
      %19 = sbr.rel target = $region3
    $region8: #{tpu_custom_call.1} parent=1 // loop_exit
      _
    %1405 = vsyncpa [#allocation4], 1
    %s1406 = scalar_lea.sflag [#allocation4], 1
    %1407 = vsyncpa %s1406, 1

</llo_original>
